<compile_context>
chip_gen: v6e
topology: v6e:2x2x1
jax: 0.10.0
libtpu: 0.0.40
codegen_flags: <defaults>
</compile_context>

<pallas_src>
import functools

import jax
import jax.numpy as jnp
from jax.experimental import pallas as pl
from jax.experimental.pallas import tpu as pltpu

NUM_CLASSES = 10


# ---------------------------------------------------------------------------
# Pallas kernels
# ---------------------------------------------------------------------------

def _conv1_pool_kernel(xcol_ref, w_ref, b_ref, o_ref):
    """One K=36 im2col GEMM (MXU) + bias + ReLU + 2x2 max-pool (VPU).

    xcol_ref: [4*B*Ho*Wo, 36] bf16, rows ordered (py, px, b, hp, wp)
    w_ref   : [36, 32] bf16
    b_ref   : [1, 32]  f32
    o_ref   : [B*Ho*Wo, 32] f32, rows ordered (b, hp, wp)
    """
    h = jnp.dot(xcol_ref[...], w_ref[...], preferred_element_type=jnp.float32)
    h = jnp.maximum(h + b_ref[...], 0.0)
    q = h.shape[0] // 4
    # max-pool = elementwise max of the 4 contiguous (py, px) row blocks
    o_ref[...] = jnp.maximum(jnp.maximum(h[0:q], h[q:2 * q]),
                             jnp.maximum(h[2 * q:3 * q], h[3 * q:4 * q]))


def _conv2_head_kernel(xcol_ref, w2_ref, b2_ref, wf1_ref, bf1_ref,
                       wf2_ref, bf2_ref, wf3_ref, bf3_ref, o_ref, *, batch):
    """conv2 (K=288 GEMM) + bias + ReLU + 2x2 max-pool + 2x2 avg-pool + fc1/fc2/fc3.

    xcol_ref: [64*B, 288] bf16, rows ordered (py, px, qy, qx, ho, wo, b)
    wf1_ref : [4, 64, 256] bf16 -- fc1 weight with the torch.flatten (c*4 + s) order
              folded into per-spatial-position sub-weights
    o_ref   : [B, num_classes] f32
    """
    h = jnp.dot(xcol_ref[...], w2_ref[...], preferred_element_type=jnp.float32)
    h = jnp.maximum(h + b2_ref[...], 0.0)                              # [64B, 64]

    q = h.shape[0] // 4                                                # 16B
    m = jnp.maximum(jnp.maximum(h[0:q], h[q:2 * q]),
                    jnp.maximum(h[2 * q:3 * q], h[3 * q:4 * q]))       # [16B, 64]

    r = q // 4                                                         # 4B
    # AdaptiveAvgPool2d((2,2)) on the 4x4 map = mean of the 4 contiguous (qy,qx) blocks
    g = 0.25 * (m[0:r] + m[r:2 * r] + m[2 * r:3 * r] + m[3 * r:4 * r])  # [4B, 64], rows (s, b)

    # fc1 with torch.flatten folded in: out[b] = sum_s g[s*B + b, :] @ Wf1[s]
    acc = jnp.zeros((batch, bf1_ref.shape[-1]), jnp.float32)
    for s in range(4):
        gs = g[s * batch:(s + 1) * batch, :].astype(wf1_ref.dtype)
        acc = acc + jnp.dot(gs, wf1_ref[s], preferred_element_type=jnp.float32)
    f = jnp.maximum(acc + bf1_ref[...], 0.0)

    f = jnp.dot(f.astype(wf2_ref.dtype), wf2_ref[...],
                preferred_element_type=jnp.float32)
    f = jnp.maximum(f + bf2_ref[...], 0.0)

    out = jnp.dot(f.astype(wf3_ref.dtype), wf3_ref[...],
                  preferred_element_type=jnp.float32)
    o_ref[...] = (out + bf3_ref[...]).astype(o_ref.dtype)


# ---------------------------------------------------------------------------
# pallas_call wrappers
# ---------------------------------------------------------------------------

def _full_spec(arr):
    n = arr.ndim
    return pl.BlockSpec(arr.shape, lambda i, n=n: (0,) * n)


def conv1_pool(xcol, w, b, out_rows):
    return pl.pallas_call(
        _conv1_pool_kernel,
        out_shape=jax.ShapeDtypeStruct((out_rows, w.shape[1]), jnp.float32),
        grid=(1,),
        in_specs=[_full_spec(xcol), _full_spec(w), _full_spec(b)],
        out_specs=pl.BlockSpec((out_rows, w.shape[1]), lambda i: (0, 0)),
        compiler_params=pltpu.CompilerParams(dimension_semantics=("arbitrary",)),
    )(xcol, w, b)


def conv2_head(xcol2, w2, b2, wf1, bf1, wf2, bf2, wf3, bf3, batch):
    args = (xcol2, w2, b2, wf1, bf1, wf2, bf2, wf3, bf3)
    n_out = wf3.shape[1]
    return pl.pallas_call(
        functools.partial(_conv2_head_kernel, batch=batch),
        out_shape=jax.ShapeDtypeStruct((batch, n_out), jnp.float32),
        grid=(1,),
        in_specs=[_full_spec(a) for a in args],
        out_specs=pl.BlockSpec((batch, n_out), lambda i: (0, 0)),
        compiler_params=pltpu.CompilerParams(dimension_semantics=("arbitrary",)),
    )(*args)


# ---------------------------------------------------------------------------
# Parameter preparation (trace-time folding; no kernels involved)
# ---------------------------------------------------------------------------

def prepare_kernel_params(params, mean, std, normalize):
    cin = params["conv1_w"].shape[2]                      # 4
    c1 = params["conv1_w"].shape[3]                       # 32
    c2in = params["conv2_w"].shape[2]                     # 32
    c2 = params["conv2_w"].shape[3]                       # 64
    n_hidden = params["fc1_w"].shape[1]                   # 256

    if normalize:
        scale = (1.0 / std).astype(jnp.float32)
        shift = (-mean / std).astype(jnp.float32)
    else:
        scale = jnp.ones((cin,), jnp.float32)
        shift = jnp.zeros((cin,), jnp.float32)

    # torch.flatten(NCHW) index = c*4 + (ho*2 + wo); fold that ordering into
    # per-spatial-position fc1 sub-weights so the kernel consumes the
    # (s, b)-ordered avg-pool rows directly (no feats gather/reshape).
    wf1 = jnp.transpose(params["fc1_w"].reshape(c2, 4, n_hidden), (1, 0, 2))

    return {
        "in_scale": scale, "in_shift": shift,
        "w1": params["conv1_w"].reshape(9 * cin, c1).astype(jnp.bfloat16),
        "b1": params["conv1_b"].reshape(1, c1).astype(jnp.float32),
        "w2": params["conv2_w"].reshape(9 * c2in, c2).astype(jnp.bfloat16),
        "b2": params["conv2_b"].reshape(1, c2).astype(jnp.float32),
        "fc1_w": wf1.astype(jnp.bfloat16),
        "fc1_b": params["fc1_b"].reshape(1, -1).astype(jnp.float32),
        "fc2_w": params["fc2_w"].astype(jnp.bfloat16),
        "fc2_b": params["fc2_b"].reshape(1, -1).astype(jnp.float32),
        "fc3_w": params["fc3_w"].astype(jnp.bfloat16),
        "fc3_b": params["fc3_b"].reshape(1, -1).astype(jnp.float32),
    }


# ---------------------------------------------------------------------------
# Forward pass
# ---------------------------------------------------------------------------

def _im2col_3x3(xp, h_out, w_out):
    """[B, H+2, W+2, C] -> [B, H, W, 9*C], column order (dy, dx, c)."""
    taps = [xp[:, dy:dy + h_out, dx:dx + w_out, :]
            for dy in range(3) for dx in range(3)]
    return jnp.concatenate(taps, axis=-1)


@jax.jit
def vgg_forward(kp, x_nchw):
    # NCHW (PyTorch convention) -> NHWC
    x = jnp.transpose(x_nchw, (0, 2, 3, 1)).astype(jnp.float32)
    B, H, W, Cin = x.shape
    assert H == 16 and W == 16, "head assumes two 2x2 pools down to a 4x4 map"

    # input normalization fused into the im2col gather (no separate kernel / HBM pass)
    x = x * kp["in_scale"] + kp["in_shift"]
    xp = jnp.pad(x, ((0, 0), (1, 1), (1, 1), (0, 0)))
    cols = _im2col_3x3(xp, H, W)                                   # [B, 16, 16, 36]
    # rows ordered (py, px, b, hp, wp): the in-kernel max-pool is 4 contiguous blocks
    c6 = cols.reshape(B, H // 2, 2, W // 2, 2, 9 * Cin)
    xcol1 = jnp.transpose(c6, (2, 4, 0, 1, 3, 5)).reshape(
        4 * B * (H // 2) * (W // 2), 9 * Cin)
    pooled1 = conv1_pool(xcol1.astype(jnp.bfloat16), kp["w1"], kp["b1"],
                         B * (H // 2) * (W // 2))                  # [B*64, 32], rows (b,hp,wp)

    H2, W2 = H // 2, W // 2
    C1 = pooled1.shape[-1]
    pp = jnp.pad(pooled1.reshape(B, H2, W2, C1), ((0, 0), (1, 1), (1, 1), (0, 0)))
    cols2 = _im2col_3x3(pp, H2, W2)                                # [B, 8, 8, 288]
    # rows ordered (py, px, qy, qx, ho, wo, b): max-pool and adaptive avg-pool become
    # contiguous row-block reductions; fc1 consumes the (s = ho*2+wo, b)-ordered rows.
    c8 = cols2.reshape(B, 2, 2, 2, 2, 2, 2, 9 * C1)                # (b, ho, qy, py, wo, qx, px, k)
    xcol2 = jnp.transpose(c8, (3, 6, 2, 5, 1, 4, 0, 7)).reshape(B * H2 * W2, 9 * C1)

    logits = conv2_head(xcol2.astype(jnp.bfloat16), kp["w2"], kp["b2"],
                        kp["fc1_w"], kp["fc1_b"], kp["fc2_w"], kp["fc2_b"],
                        kp["fc3_w"], kp["fc3_b"], B)               # [B, 10]
    return logits


def init_params(key):
    # Deterministic synthetic parameters (scaled ~ 1/sqrt(fan_in)).
    ks = jax.random.split(key, 10)

    def w_init(k, shape, fan_in):
        return (jax.random.normal(k, shape, jnp.float32)
                / jnp.sqrt(fan_in)).astype(jnp.float32)

    return {
        "conv1_w": w_init(ks[0], (3, 3, 4, 32), 3 * 3 * 4),
        "conv1_b": jnp.zeros((32,), jnp.float32),
        "conv2_w": w_init(ks[1], (3, 3, 32, 64), 3 * 3 * 32),
        "conv2_b": jnp.zeros((64,), jnp.float32),
        "fc1_w": w_init(ks[2], (256, 256), 256),
        "fc1_b": jnp.zeros((256,), jnp.float32),
        "fc2_w": w_init(ks[3], (256, 256), 256),
        "fc2_b": jnp.zeros((256,), jnp.float32),
        "fc3_w": w_init(ks[4], (256, NUM_CLASSES), 256),
        "fc3_b": jnp.zeros((NUM_CLASSES,), jnp.float32),
    }


if __name__ == "__main__":
    key = jax.random.PRNGKey(0)
    kparam, kx = jax.random.split(key)

    params = init_params(kparam)
    mean = jnp.array([0.40, 0.45, 0.50, 0.55], jnp.float32)   # per input channel
    std = jnp.array([0.20, 0.22, 0.24, 0.26], jnp.float32)

    # TODO(synk): the prunable `linear_layer` is treated as a plain affine layer
    # (its forward semantics in eval mode); pruning masks are not modeled.
    kernel_params = prepare_kernel_params(params, mean, std, normalize=True)

    # PyTorch-convention NCHW input: batch=2, channels=4, spatial=16x16
    x = jax.random.normal(kx, (2, 4, 16, 16), jnp.float32)

    out = vgg_forward(kernel_params, x)
    out = jax.block_until_ready(out)
    assert out.shape == (2, NUM_CLASSES) and out.dtype == jnp.float32
    print("KERNEL_OK")
</pallas_src>

<mosaic_0001>
module attributes {stable_mosaic.version = 11 : i64} {
  func.func @_conv1_pool_kernel(%arg0: i32, %arg1: memref<512x36xbf16, #tpu.memory_space<vmem>>, %arg2: memref<36x32xbf16, #tpu.memory_space<vmem>>, %arg3: memref<1x32xf32, #tpu.memory_space<vmem>>, %arg4: memref<128x32xf32, #tpu.memory_space<vmem>>) attributes {dimension_semantics = [#tpu.dimension_semantics<arbitrary>], iteration_bounds = array<i64: 1>, scalar_prefetch = 0 : i64, scratch_operands = 0 : i64, tpu.core_type = #tpu.core_type<tc>, window_params = [{pipeline_mode = #tpu.pipeline_mode<synchronous>, transform_indices = @transform_0, window_bounds = array<i64: 512, 36>}, {pipeline_mode = #tpu.pipeline_mode<synchronous>, transform_indices = @transform_1, window_bounds = array<i64: 36, 32>}, {pipeline_mode = #tpu.pipeline_mode<synchronous>, transform_indices = @transform_2, window_bounds = array<i64: 1, 32>}, {pipeline_mode = #tpu.pipeline_mode<synchronous>, transform_indices = @transform_3, window_bounds = array<i64: 128, 32>}]} {
    %c0 = arith.constant 0 : index
    %c0_0 = arith.constant 0 : index
    %0 = vector.load %arg1[%c0, %c0_0] : memref<512x36xbf16, #tpu.memory_space<vmem>>, vector<512x36xbf16>
    %c0_1 = arith.constant 0 : index
    %c0_2 = arith.constant 0 : index
    %1 = vector.load %arg2[%c0_1, %c0_2] : memref<36x32xbf16, #tpu.memory_space<vmem>>, vector<36x32xbf16>
    %cst = arith.constant dense<0.000000e+00> : vector<512x32xf32>
    %2 = tpu.matmul %0, %1, %cst {dimension_numbers = #tpu.dot_dimension_numbers<[1], [0], [0], [1], [0, 0, 1, 1], [], []>} : vector<512x36xbf16>, vector<36x32xbf16>, vector<512x32xf32> -> vector<512x32xf32>
    %c0_3 = arith.constant 0 : index
    %c0_4 = arith.constant 0 : index
    %3 = vector.load %arg3[%c0_3, %c0_4] : memref<1x32xf32, #tpu.memory_space<vmem>>, vector<1x32xf32>
    %4 = vector.broadcast %3 : vector<1x32xf32> to vector<512x32xf32>
    %5 = arith.addf %2, %4 : vector<512x32xf32>
    %cst_5 = arith.constant 0.000000e+00 : f32
    %6 = vector.broadcast %cst_5 : f32 to vector<512x32xf32>
    %7 = arith.maximumf %5, %6 : vector<512x32xf32>
    %8 = vector.extract_strided_slice %7 {offsets = [0, 0], sizes = [128, 32], strides = [1, 1]} : vector<512x32xf32> to vector<128x32xf32>
    %9 = vector.extract_strided_slice %7 {offsets = [128, 0], sizes = [128, 32], strides = [1, 1]} : vector<512x32xf32> to vector<128x32xf32>
    %10 = arith.maximumf %8, %9 : vector<128x32xf32>
    %11 = vector.extract_strided_slice %7 {offsets = [256, 0], sizes = [128, 32], strides = [1, 1]} : vector<512x32xf32> to vector<128x32xf32>
    %12 = vector.extract_strided_slice %7 {offsets = [384, 0], sizes = [128, 32], strides = [1, 1]} : vector<512x32xf32> to vector<128x32xf32>
    %13 = arith.maximumf %11, %12 : vector<128x32xf32>
    %14 = arith.maximumf %10, %13 : vector<128x32xf32>
    %c0_6 = arith.constant 0 : index
    %c0_7 = arith.constant 0 : index
    %15 = vector.load %arg4[%c0_6, %c0_7] : memref<128x32xf32, #tpu.memory_space<vmem>>, vector<128x32xf32>
    tpu.vector_store %arg4[%c0_6, %c0_7], %14 {strides = array<i32>} : memref<128x32xf32, #tpu.memory_space<vmem>>, vector<128x32xf32>,
    return
  }
  func.func @transform_0(%arg0: i32) -> (i32, i32) {
    %c0_i32 = arith.constant 0 : i32
    %c0_i32_0 = arith.constant 0 : i32
    %c0_i32_1 = arith.constant 0 : i32
    return %c0_i32, %c0_i32_0 : i32, i32
  }
  func.func @transform_1(%arg0: i32) -> (i32, i32) {
    %c0_i32 = arith.constant 0 : i32
    %c0_i32_0 = arith.constant 0 : i32
    %c0_i32_1 = arith.constant 0 : i32
    return %c0_i32, %c0_i32_0 : i32, i32
  }
  func.func @transform_2(%arg0: i32) -> (i32, i32) {
    %c0_i32 = arith.constant 0 : i32
    %c0_i32_0 = arith.constant 0 : i32
    %c0_i32_1 = arith.constant 0 : i32
    return %c0_i32, %c0_i32_0 : i32, i32
  }
  func.func @transform_3(%arg0: i32) -> (i32, i32) {
    %c0_i32 = arith.constant 0 : i32
    %c0_i32_0 = arith.constant 0 : i32
    %c0_i32_1 = arith.constant 0 : i32
    return %c0_i32, %c0_i32_0 : i32, i32
  }
}

module attributes {stable_mosaic.version = 11 : i64} {
  func.func @_conv2_head_kernel(%arg0: i32, %arg1: memref<128x288xbf16, #tpu.memory_space<vmem>>, %arg2: memref<288x64xbf16, #tpu.memory_space<vmem>>, %arg3: memref<1x64xf32, #tpu.memory_space<vmem>>, %arg4: memref<4x64x256xbf16, #tpu.memory_space<vmem>>, %arg5: memref<1x256xf32, #tpu.memory_space<vmem>>, %arg6: memref<256x256xbf16, #tpu.memory_space<vmem>>, %arg7: memref<1x256xf32, #tpu.memory_space<vmem>>, %arg8: memref<256x10xbf16, #tpu.memory_space<vmem>>, %arg9: memref<1x10xf32, #tpu.memory_space<vmem>>, %arg10: memref<2x10xf32, #tpu.memory_space<vmem>>) attributes {dimension_semantics = [#tpu.dimension_semantics<arbitrary>], iteration_bounds = array<i64: 1>, scalar_prefetch = 0 : i64, scratch_operands = 0 : i64, tpu.core_type = #tpu.core_type<tc>, window_params = [{pipeline_mode = #tpu.pipeline_mode<synchronous>, transform_indices = @transform_0, window_bounds = array<i64: 128, 288>}, {pipeline_mode = #tpu.pipeline_mode<synchronous>, transform_indices = @transform_1, window_bounds = array<i64: 288, 64>}, {pipeline_mode = #tpu.pipeline_mode<synchronous>, transform_indices = @transform_2, window_bounds = array<i64: 1, 64>}, {pipeline_mode = #tpu.pipeline_mode<synchronous>, transform_indices = @transform_3, window_bounds = array<i64: 4, 64, 256>}, {pipeline_mode = #tpu.pipeline_mode<synchronous>, transform_indices = @transform_4, window_bounds = array<i64: 1, 256>}, {pipeline_mode = #tpu.pipeline_mode<synchronous>, transform_indices = @transform_5, window_bounds = array<i64: 256, 256>}, {pipeline_mode = #tpu.pipeline_mode<synchronous>, transform_indices = @transform_6, window_bounds = array<i64: 1, 256>}, {pipeline_mode = #tpu.pipeline_mode<synchronous>, transform_indices = @transform_7, window_bounds = array<i64: 256, 10>}, {pipeline_mode = #tpu.pipeline_mode<synchronous>, transform_indices = @transform_8, window_bounds = array<i64: 1, 10>}, {pipeline_mode = #tpu.pipeline_mode<synchronous>, transform_indices = @transform_9, window_bounds = array<i64: 2, 10>}]} {
    %c0 = arith.constant 0 : index
    %c0_0 = arith.constant 0 : index
    %0 = vector.load %arg1[%c0, %c0_0] : memref<128x288xbf16, #tpu.memory_space<vmem>>, vector<128x288xbf16>
    %c0_1 = arith.constant 0 : index
    %c0_2 = arith.constant 0 : index
    %1 = vector.load %arg2[%c0_1, %c0_2] : memref<288x64xbf16, #tpu.memory_space<vmem>>, vector<288x64xbf16>
    %cst = arith.constant dense<0.000000e+00> : vector<128x64xf32>
    %2 = tpu.matmul %0, %1, %cst {dimension_numbers = #tpu.dot_dimension_numbers<[1], [0], [0], [1], [0, 0, 1, 1], [], []>} : vector<128x288xbf16>, vector<288x64xbf16>, vector<128x64xf32> -> vector<128x64xf32>
    %c0_3 = arith.constant 0 : index
    %c0_4 = arith.constant 0 : index
    %3 = vector.load %arg3[%c0_3, %c0_4] : memref<1x64xf32, #tpu.memory_space<vmem>>, vector<1x64xf32>
    %4 = vector.broadcast %3 : vector<1x64xf32> to vector<128x64xf32>
    %5 = arith.addf %2, %4 : vector<128x64xf32>
    %cst_5 = arith.constant 0.000000e+00 : f32
    %6 = vector.broadcast %cst_5 : f32 to vector<128x64xf32>
    %7 = arith.maximumf %5, %6 : vector<128x64xf32>
    %8 = vector.extract_strided_slice %7 {offsets = [0, 0], sizes = [32, 64], strides = [1, 1]} : vector<128x64xf32> to vector<32x64xf32>
    %9 = vector.extract_strided_slice %7 {offsets = [32, 0], sizes = [32, 64], strides = [1, 1]} : vector<128x64xf32> to vector<32x64xf32>
    %10 = arith.maximumf %8, %9 : vector<32x64xf32>
    %11 = vector.extract_strided_slice %7 {offsets = [64, 0], sizes = [32, 64], strides = [1, 1]} : vector<128x64xf32> to vector<32x64xf32>
    %12 = vector.extract_strided_slice %7 {offsets = [96, 0], sizes = [32, 64], strides = [1, 1]} : vector<128x64xf32> to vector<32x64xf32>
    %13 = arith.maximumf %11, %12 : vector<32x64xf32>
    %14 = arith.maximumf %10, %13 : vector<32x64xf32>
    %15 = vector.extract_strided_slice %14 {offsets = [0, 0], sizes = [8, 64], strides = [1, 1]} : vector<32x64xf32> to vector<8x64xf32>
    %16 = vector.extract_strided_slice %14 {offsets = [8, 0], sizes = [8, 64], strides = [1, 1]} : vector<32x64xf32> to vector<8x64xf32>
    %17 = arith.addf %15, %16 : vector<8x64xf32>
    %18 = vector.extract_strided_slice %14 {offsets = [16, 0], sizes = [8, 64], strides = [1, 1]} : vector<32x64xf32> to vector<8x64xf32>
    %19 = arith.addf %17, %18 : vector<8x64xf32>
    %20 = vector.extract_strided_slice %14 {offsets = [24, 0], sizes = [8, 64], strides = [1, 1]} : vector<32x64xf32> to vector<8x64xf32>
    %21 = arith.addf %19, %20 : vector<8x64xf32>
    %cst_6 = arith.constant 2.500000e-01 : f32
    %22 = vector.broadcast %cst_6 : f32 to vector<8x64xf32>
    %23 = arith.mulf %22, %21 : vector<8x64xf32>
    %cst_7 = arith.constant 0.000000e+00 : f32
    %24 = vector.broadcast %cst_7 : f32 to vector<2x256xf32>
    %25 = vector.extract_strided_slice %23 {offsets = [0, 0], sizes = [2, 64], strides = [1, 1]} : vector<8x64xf32> to vector<2x64xf32>
    %26 = arith.truncf %25 : vector<2x64xf32> to vector<2x64xbf16>
    %c0_8 = arith.constant 0 : index
    %c0_9 = arith.constant 0 : index
    %c0_10 = arith.constant 0 : index
    %27 = vector.load %arg4[%c0_8, %c0_9, %c0_10] : memref<4x64x256xbf16, #tpu.memory_space<vmem>>, vector<1x64x256xbf16>
    %28 = vector.shape_cast %27 : vector<1x64x256xbf16> to vector<64x256xbf16>
    %cst_11 = arith.constant dense<0.000000e+00> : vector<2x256xf32>
    %29 = tpu.matmul %26, %28, %cst_11 {dimension_numbers = #tpu.dot_dimension_numbers<[1], [0], [0], [1], [0, 0, 1, 1], [], []>} : vector<2x64xbf16>, vector<64x256xbf16>, vector<2x256xf32> -> vector<2x256xf32>
    %30 = arith.addf %24, %29 : vector<2x256xf32>
    %31 = vector.extract_strided_slice %23 {offsets = [2, 0], sizes = [2, 64], strides = [1, 1]} : vector<8x64xf32> to vector<2x64xf32>
    %32 = arith.truncf %31 : vector<2x64xf32> to vector<2x64xbf16>
    %c1 = arith.constant 1 : index
    %c0_12 = arith.constant 0 : index
    %c0_13 = arith.constant 0 : index
    %33 = vector.load %arg4[%c1, %c0_12, %c0_13] : memref<4x64x256xbf16, #tpu.memory_space<vmem>>, vector<1x64x256xbf16>
    %34 = vector.shape_cast %33 : vector<1x64x256xbf16> to vector<64x256xbf16>
    %cst_14 = arith.constant dense<0.000000e+00> : vector<2x256xf32>
    %35 = tpu.matmul %32, %34, %cst_14 {dimension_numbers = #tpu.dot_dimension_numbers<[1], [0], [0], [1], [0, 0, 1, 1], [], []>} : vector<2x64xbf16>, vector<64x256xbf16>, vector<2x256xf32> -> vector<2x256xf32>
    %36 = arith.addf %30, %35 : vector<2x256xf32>
    %37 = vector.extract_strided_slice %23 {offsets = [4, 0], sizes = [2, 64], strides = [1, 1]} : vector<8x64xf32> to vector<2x64xf32>
    %38 = arith.truncf %37 : vector<2x64xf32> to vector<2x64xbf16>
    %c2 = arith.constant 2 : index
    %c0_15 = arith.constant 0 : index
    %c0_16 = arith.constant 0 : index
    %39 = vector.load %arg4[%c2, %c0_15, %c0_16] : memref<4x64x256xbf16, #tpu.memory_space<vmem>>, vector<1x64x256xbf16>
    %40 = vector.shape_cast %39 : vector<1x64x256xbf16> to vector<64x256xbf16>
    %cst_17 = arith.constant dense<0.000000e+00> : vector<2x256xf32>
    %41 = tpu.matmul %38, %40, %cst_17 {dimension_numbers = #tpu.dot_dimension_numbers<[1], [0], [0], [1], [0, 0, 1, 1], [], []>} : vector<2x64xbf16>, vector<64x256xbf16>, vector<2x256xf32> -> vector<2x256xf32>
    %42 = arith.addf %36, %41 : vector<2x256xf32>
    %43 = vector.extract_strided_slice %23 {offsets = [6, 0], sizes = [2, 64], strides = [1, 1]} : vector<8x64xf32> to vector<2x64xf32>
    %44 = arith.truncf %43 : vector<2x64xf32> to vector<2x64xbf16>
    %c3 = arith.constant 3 : index
    %c0_18 = arith.constant 0 : index
    %c0_19 = arith.constant 0 : index
    %45 = vector.load %arg4[%c3, %c0_18, %c0_19] : memref<4x64x256xbf16, #tpu.memory_space<vmem>>, vector<1x64x256xbf16>
    %46 = vector.shape_cast %45 : vector<1x64x256xbf16> to vector<64x256xbf16>
    %cst_20 = arith.constant dense<0.000000e+00> : vector<2x256xf32>
    %47 = tpu.matmul %44, %46, %cst_20 {dimension_numbers = #tpu.dot_dimension_numbers<[1], [0], [0], [1], [0, 0, 1, 1], [], []>} : vector<2x64xbf16>, vector<64x256xbf16>, vector<2x256xf32> -> vector<2x256xf32>
    %48 = arith.addf %42, %47 : vector<2x256xf32>
    %c0_21 = arith.constant 0 : index
    %c0_22 = arith.constant 0 : index
    %49 = vector.load %arg5[%c0_21, %c0_22] : memref<1x256xf32, #tpu.memory_space<vmem>>, vector<1x256xf32>
    %50 = vector.broadcast %49 : vector<1x256xf32> to vector<2x256xf32>
    %51 = arith.addf %48, %50 : vector<2x256xf32>
    %cst_23 = arith.constant 0.000000e+00 : f32
    %52 = vector.broadcast %cst_23 : f32 to vector<2x256xf32>
    %53 = arith.maximumf %51, %52 : vector<2x256xf32>
    %54 = arith.truncf %53 : vector<2x256xf32> to vector<2x256xbf16>
    %c0_24 = arith.constant 0 : index
    %c0_25 = arith.constant 0 : index
    %55 = vector.load %arg6[%c0_24, %c0_25] : memref<256x256xbf16, #tpu.memory_space<vmem>>, vector<256x256xbf16>
    %cst_26 = arith.constant dense<0.000000e+00> : vector<2x256xf32>
    %56 = tpu.matmul %54, %55, %cst_26 {dimension_numbers = #tpu.dot_dimension_numbers<[1], [0], [0], [1], [0, 0, 1, 1], [], []>} : vector<2x256xbf16>, vector<256x256xbf16>, vector<2x256xf32> -> vector<2x256xf32>
    %c0_27 = arith.constant 0 : index
    %c0_28 = arith.constant 0 : index
    %57 = vector.load %arg7[%c0_27, %c0_28] : memref<1x256xf32, #tpu.memory_space<vmem>>, vector<1x256xf32>
    %58 = vector.broadcast %57 : vector<1x256xf32> to vector<2x256xf32>
    %59 = arith.addf %56, %58 : vector<2x256xf32>
    %cst_29 = arith.constant 0.000000e+00 : f32
    %60 = vector.broadcast %cst_29 : f32 to vector<2x256xf32>
    %61 = arith.maximumf %59, %60 : vector<2x256xf32>
    %62 = arith.truncf %61 : vector<2x256xf32> to vector<2x256xbf16>
    %c0_30 = arith.constant 0 : index
    %c0_31 = arith.constant 0 : index
    %63 = vector.load %arg8[%c0_30, %c0_31] : memref<256x10xbf16, #tpu.memory_space<vmem>>, vector<256x10xbf16>
    %cst_32 = arith.constant dense<0.000000e+00> : vector<2x10xf32>
    %64 = tpu.matmul %62, %63, %cst_32 {dimension_numbers = #tpu.dot_dimension_numbers<[1], [0], [0], [1], [0, 0, 1, 1], [], []>} : vector<2x256xbf16>, vector<256x10xbf16>, vector<2x10xf32> -> vector<2x10xf32>
    %c0_33 = arith.constant 0 : index
    %c0_34 = arith.constant 0 : index
    %65 = vector.load %arg9[%c0_33, %c0_34] : memref<1x10xf32, #tpu.memory_space<vmem>>, vector<1x10xf32>
    %66 = vector.broadcast %65 : vector<1x10xf32> to vector<2x10xf32>
    %67 = arith.addf %64, %66 : vector<2x10xf32>
    %c0_35 = arith.constant 0 : index
    %c0_36 = arith.constant 0 : index
    %68 = vector.load %arg10[%c0_35, %c0_36] : memref<2x10xf32, #tpu.memory_space<vmem>>, vector<2x10xf32>
    tpu.vector_store %arg10[%c0_35, %c0_36], %67 {strides = array<i32>} : memref<2x10xf32, #tpu.memory_space<vmem>>, vector<2x10xf32>,
    return
  }
  func.func @transform_0(%arg0: i32) -> (i32, i32) {
    %c0_i32 = arith.constant 0 : i32
    %c0_i32_0 = arith.constant 0 : i32
    %c0_i32_1 = arith.constant 0 : i32
    return %c0_i32, %c0_i32_0 : i32, i32
  }
  func.func @transform_1(%arg0: i32) -> (i32, i32) {
    %c0_i32 = arith.constant 0 : i32
    %c0_i32_0 = arith.constant 0 : i32
    %c0_i32_1 = arith.constant 0 : i32
    return %c0_i32, %c0_i32_0 : i32, i32
  }
  func.func @transform_2(%arg0: i32) -> (i32, i32) {
    %c0_i32 = arith.constant 0 : i32
    %c0_i32_0 = arith.constant 0 : i32
    %c0_i32_1 = arith.constant 0 : i32
    return %c0_i32, %c0_i32_0 : i32, i32
  }
  func.func @transform_3(%arg0: i32) -> (i32, i32, i32) {
    %c0_i32 = arith.constant 0 : i32
    %c0_i32_0 = arith.constant 0 : i32
    %c0_i32_1 = arith.constant 0 : i32
    %c0_i32_2 = arith.constant 0 : i32
    return %c0_i32, %c0_i32_0, %c0_i32_1 : i32, i32, i32
  }
  func.func @transform_4(%arg0: i32) -> (i32, i32) {
    %c0_i32 = arith.constant 0 : i32
    %c0_i32_0 = arith.constant 0 : i32
    %c0_i32_1 = arith.constant 0 : i32
    return %c0_i32, %c0_i32_0 : i32, i32
  }
  func.func @transform_5(%arg0: i32) -> (i32, i32) {
    %c0_i32 = arith.constant 0 : i32
    %c0_i32_0 = arith.constant 0 : i32
    %c0_i32_1 = arith.constant 0 : i32
    return %c0_i32, %c0_i32_0 : i32, i32
  }
  func.func @transform_6(%arg0: i32) -> (i32, i32) {
    %c0_i32 = arith.constant 0 : i32
    %c0_i32_0 = arith.constant 0 : i32
    %c0_i32_1 = arith.constant 0 : i32
    return %c0_i32, %c0_i32_0 : i32, i32
  }
  func.func @transform_7(%arg0: i32) -> (i32, i32) {
    %c0_i32 = arith.constant 0 : i32
    %c0_i32_0 = arith.constant 0 : i32
    %c0_i32_1 = arith.constant 0 : i32
    return %c0_i32, %c0_i32_0 : i32, i32
  }
  func.func @transform_8(%arg0: i32) -> (i32, i32) {
    %c0_i32 = arith.constant 0 : i32
    %c0_i32_0 = arith.constant 0 : i32
    %c0_i32_1 = arith.constant 0 : i32
    return %c0_i32, %c0_i32_0 : i32, i32
  }
  func.func @transform_9(%arg0: i32) -> (i32, i32) {
    %c0_i32 = arith.constant 0 : i32
    %c0_i32_0 = arith.constant 0 : i32
    %c0_i32_1 = arith.constant 0 : i32
    return %c0_i32, %c0_i32_0 : i32, i32
  }
}

</mosaic_0001>

<llo_original>
// kernel: vgg_forward.2
$region0: #{vgg_forward.2}
  #allocation0 [shape = 'u32[]', space=smem, size = 0x4, offset = 0x4, fixed_abs, tag = 'smem constant byte address 0x4 - core index']
  #allocation1 [shape = 'u32[144,128]{1,0:T(1,128)}', space=vmem, size = 0x12000, scoped, tag = 'internal scratch']
  %s0 = inlined_call_operand.vmem [shape: bf16[512,36], index: 0, kind: input, shape index: {}]
  %s1 = inlined_call_operand.vmem [shape: bf16[36,32], index: 1, kind: input, shape index: {}]
  %s2 = inlined_call_operand.vmem [shape: f32[1,32], index: 2, kind: input, shape index: {}]
  %s3 = inlined_call_operand.vmem [shape: f32[128,32], index: 3, kind: output, shape index: {}]
  %s4 = sld [smem:[#allocation0]]
  $region22: #{vgg_forward.2} parent=0
    _
  %s6 = ssub.s32 1, %s4
  %s7 = scalar_select 0, %s6, %s4
  // Predicated region
  $region2: #{vgg_forward.2} parent=0 // pred_check
    _
  $region3: #{vgg_forward.2} parent=0 // pred_check_branch
    %9 = sbr.rel (0) target = $region5
  $region4: #{vgg_forward.2} parent=0 // pred_region
    _
  $region5: #{vgg_forward.2} parent=0 // pred_fallthru
    _
  // Predicated region
  $region6: #{vgg_forward.2} parent=0 // pred_check
    _
  $region7: #{vgg_forward.2} parent=0 // pred_check_branch
    %11 = sbr.rel (0) target = $region9
  $region8: #{vgg_forward.2} parent=0 // pred_region
    _
  $region9: #{vgg_forward.2} parent=0 // pred_fallthru
    _
  // Predicated region
  $region10: #{vgg_forward.2} parent=0 // pred_check
    _
  $region11: #{vgg_forward.2} parent=0 // pred_check_branch
    %13 = sbr.rel (0) target = $region13
  $region12: #{vgg_forward.2} parent=0 // pred_region
    _
  $region13: #{vgg_forward.2} parent=0 // pred_fallthru
    _
  %v15 = vld [vmem:[%s0] sm:$0xf]
  %v16 = vld [vmem:[%s0 + $0x4] sm:$0xf]
  %v17 = vld [vmem:[%s0 + $0x8] sm:$0xf]
  %v18 = vld [vmem:[%s0 + $0xc] sm:$0xf]
  %v19 = vld [vmem:[%s0 + $0x10] sm:$0xf]
  %v20 = vld [vmem:[%s0 + $0x14] sm:$0xf]
  %v21 = vld [vmem:[%s0 + $0x18] sm:$0xf]
  %v22 = vld [vmem:[%s0 + $0x1c] sm:$0xf]
  %v23 = vld [vmem:[%s0 + $0x20] sm:$0xf]
  %v24 = vld [vmem:[%s0 + $0x24] sm:$0xf]
  %v25 = vld [vmem:[%s0 + $0x28] sm:$0xf]
  %v26 = vld [vmem:[%s0 + $0x2c] sm:$0xf]
  %v27 = vld [vmem:[%s0 + $0x30] sm:$0xf]
  %v28 = vld [vmem:[%s0 + $0x34] sm:$0xf]
  %v29 = vld [vmem:[%s0 + $0x38] sm:$0xf]
  %v30 = vld [vmem:[%s0 + $0x3c] sm:$0xf]
  %v31 = vld [vmem:[%s0 + $0x40] sm:$0xf]
  %v32 = vld [vmem:[%s0 + $0x44] sm:$0xf]
  %v33 = vld [vmem:[%s0 + $0x48] sm:$0xf]
  %v34 = vld [vmem:[%s0 + $0x4c] sm:$0xf]
  %v35 = vld [vmem:[%s0 + $0x50] sm:$0xf]
  %v36 = vld [vmem:[%s0 + $0x54] sm:$0xf]
  %v37 = vld [vmem:[%s0 + $0x58] sm:$0xf]
  %v38 = vld [vmem:[%s0 + $0x5c] sm:$0xf]
  %v39 = vld [vmem:[%s0 + $0x60] sm:$0xf]
  %v40 = vld [vmem:[%s0 + $0x64] sm:$0xf]
  %v41 = vld [vmem:[%s0 + $0x68] sm:$0xf]
  %v42 = vld [vmem:[%s0 + $0x6c] sm:$0xf]
  %v43 = vld [vmem:[%s0 + $0x70] sm:$0xf]
  %v44 = vld [vmem:[%s0 + $0x74] sm:$0xf]
  %v45 = vld [vmem:[%s0 + $0x78] sm:$0xf]
  %v46 = vld [vmem:[%s0 + $0x7c] sm:$0xf]
  %v47 = vld [vmem:[%s0 + $0x80] sm:$0xf]
  %v48 = vld [vmem:[%s0 + $0x84] sm:$0xf]
  %v49 = vld [vmem:[%s0 + $0x88] sm:$0xf]
  %v50 = vld [vmem:[%s0 + $0x8c] sm:$0xf]
  %v51 = vld [vmem:[%s0 + $0x90] sm:$0xf]
  %v52 = vld [vmem:[%s0 + $0x94] sm:$0xf]
  %v53 = vld [vmem:[%s0 + $0x98] sm:$0xf]
  %v54 = vld [vmem:[%s0 + $0x9c] sm:$0xf]
  %v55 = vld [vmem:[%s0 + $0xa0] sm:$0xf]
  %v56 = vld [vmem:[%s0 + $0xa4] sm:$0xf]
  %v57 = vld [vmem:[%s0 + $0xa8] sm:$0xf]
  %v58 = vld [vmem:[%s0 + $0xac] sm:$0xf]
  %v59 = vld [vmem:[%s0 + $0xb0] sm:$0xf]
  %v60 = vld [vmem:[%s0 + $0xb4] sm:$0xf]
  %v61 = vld [vmem:[%s0 + $0xb8] sm:$0xf]
  %v62 = vld [vmem:[%s0 + $0xbc] sm:$0xf]
  %v63 = vld [vmem:[%s0 + $0xc0] sm:$0xf]
  %v64 = vld [vmem:[%s0 + $0xc4] sm:$0xf]
  %v65 = vld [vmem:[%s0 + $0xc8] sm:$0xf]
  %v66 = vld [vmem:[%s0 + $0xcc] sm:$0xf]
  %v67 = vld [vmem:[%s0 + $0xd0] sm:$0xf]
  %v68 = vld [vmem:[%s0 + $0xd4] sm:$0xf]
  %v69 = vld [vmem:[%s0 + $0xd8] sm:$0xf]
  %v70 = vld [vmem:[%s0 + $0xdc] sm:$0xf]
  %v71 = vld [vmem:[%s0 + $0xe0] sm:$0xf]
  %v72 = vld [vmem:[%s0 + $0xe4] sm:$0xf]
  %v73 = vld [vmem:[%s0 + $0xe8] sm:$0xf]
  %v74 = vld [vmem:[%s0 + $0xec] sm:$0xf]
  %v75 = vld [vmem:[%s0 + $0xf0] sm:$0xf]
  %v76 = vld [vmem:[%s0 + $0xf4] sm:$0xf]
  %v77 = vld [vmem:[%s0 + $0xf8] sm:$0xf]
  %v78 = vld [vmem:[%s0 + $0xfc] sm:$0xf]
  %v79 = vld [vmem:[%s1] sm:$0xf]
  %v80 = vld [vmem:[%s1 + $0x4] sm:$0xf]
  %v81 = vld [vmem:[%s1 + $0x8] sm:$0xf]
  %v82 = vld [vmem:[%s1 + $0xc] sm:$0xf]
  %v83 = vld [vmem:[%s1 + $0x10] sm:$0x3]
  %v84 = vld [vmem:[%s2] sm:$0x1]
  %v86 = vlaneseq
  %v87 = vshrl.u32 %v86, 7
  %v88 = vsub.s32 0, %v87
  %v89 = vrot.slane %v84, %v88
  %v155 = vunpack.c.l.b16 %v15
  %v156 = vunpack.c.l.b16 %v16
  %v157 = vunpack.c.l.b16 %v17
  %v158 = vunpack.c.l.b16 %v18
  %v159 = vunpack.c.l.b16 %v19
  %v160 = vunpack.c.l.b16 %v20
  %v161 = vunpack.c.l.b16 %v21
  %v162 = vunpack.c.l.b16 %v22
  %v163 = vunpack.c.l.b16 %v23
  %v164 = vunpack.c.l.b16 %v24
  %v165 = vunpack.c.l.b16 %v25
  %v166 = vunpack.c.l.b16 %v26
  %v167 = vunpack.c.l.b16 %v27
  %v168 = vunpack.c.l.b16 %v28
  %v169 = vunpack.c.l.b16 %v29
  %v170 = vunpack.c.l.b16 %v30
  %v171 = vunpack.c.l.b16 %v31
  %v172 = vunpack.c.l.b16 %v32
  %v173 = vunpack.c.l.b16 %v33
  %v174 = vunpack.c.l.b16 %v34
  %v175 = vunpack.c.l.b16 %v35
  %v176 = vunpack.c.l.b16 %v36
  %v177 = vunpack.c.l.b16 %v37
  %v178 = vunpack.c.l.b16 %v38
  %v179 = vunpack.c.l.b16 %v39
  %v180 = vunpack.c.l.b16 %v40
  %v181 = vunpack.c.l.b16 %v41
  %v182 = vunpack.c.l.b16 %v42
  %v183 = vunpack.c.l.b16 %v43
  %v184 = vunpack.c.l.b16 %v44
  %v185 = vunpack.c.l.b16 %v45
  %v186 = vunpack.c.l.b16 %v46
  %v187 = vunpack.c.l.b16 %v47
  %v188 = vunpack.c.l.b16 %v48
  %v189 = vunpack.c.l.b16 %v49
  %v190 = vunpack.c.l.b16 %v50
  %v191 = vunpack.c.l.b16 %v51
  %v192 = vunpack.c.l.b16 %v52
  %v193 = vunpack.c.l.b16 %v53
  %v194 = vunpack.c.l.b16 %v54
  %v195 = vunpack.c.l.b16 %v55
  %v196 = vunpack.c.l.b16 %v56
  %v197 = vunpack.c.l.b16 %v57
  %v198 = vunpack.c.l.b16 %v58
  %v199 = vunpack.c.l.b16 %v59
  %v200 = vunpack.c.l.b16 %v60
  %v201 = vunpack.c.l.b16 %v61
  %v202 = vunpack.c.l.b16 %v62
  %v203 = vunpack.c.l.b16 %v63
  %v204 = vunpack.c.l.b16 %v64
  %v205 = vunpack.c.l.b16 %v65
  %v206 = vunpack.c.l.b16 %v66
  %v207 = vunpack.c.l.b16 %v67
  %v208 = vunpack.c.l.b16 %v68
  %v209 = vunpack.c.l.b16 %v69
  %v210 = vunpack.c.l.b16 %v70
  %v211 = vunpack.c.l.b16 %v71
  %v212 = vunpack.c.l.b16 %v72
  %v213 = vunpack.c.l.b16 %v73
  %v214 = vunpack.c.l.b16 %v74
  %v215 = vunpack.c.l.b16 %v75
  %v216 = vunpack.c.l.b16 %v76
  %v217 = vunpack.c.l.b16 %v77
  %v218 = vunpack.c.l.b16 %v78
  %v219 = vpack.c.b16 %v156, %v155
  %v220 = vpack.c.b16 %v158, %v157
  %v221 = vpack.c.b16 %v160, %v159
  %v222 = vpack.c.b16 %v162, %v161
  %v223 = vpack.c.b16 %v164, %v163
  %v224 = vpack.c.b16 %v166, %v165
  %v225 = vpack.c.b16 %v168, %v167
  %v226 = vpack.c.b16 %v170, %v169
  %v227 = vpack.c.b16 %v172, %v171
  %v228 = vpack.c.b16 %v174, %v173
  %v229 = vpack.c.b16 %v176, %v175
  %v230 = vpack.c.b16 %v178, %v177
  %v231 = vpack.c.b16 %v180, %v179
  %v232 = vpack.c.b16 %v182, %v181
  %v233 = vpack.c.b16 %v184, %v183
  %v234 = vpack.c.b16 %v186, %v185
  %v235 = vpack.c.b16 %v188, %v187
  %v236 = vpack.c.b16 %v190, %v189
  %v237 = vpack.c.b16 %v192, %v191
  %v238 = vpack.c.b16 %v194, %v193
  %v239 = vpack.c.b16 %v196, %v195
  %v240 = vpack.c.b16 %v198, %v197
  %v241 = vpack.c.b16 %v200, %v199
  %v242 = vpack.c.b16 %v202, %v201
  %v243 = vpack.c.b16 %v204, %v203
  %v244 = vpack.c.b16 %v206, %v205
  %v245 = vpack.c.b16 %v208, %v207
  %v246 = vpack.c.b16 %v210, %v209
  %v247 = vpack.c.b16 %v212, %v211
  %v248 = vpack.c.b16 %v214, %v213
  %v249 = vpack.c.b16 %v216, %v215
  %v250 = vpack.c.b16 %v218, %v217
  %v256 = vunpack.c.l.b16 %v79
  %v257 = vunpack.c.l.b16 %v80
  %v258 = vunpack.c.l.b16 %v81
  %v259 = vunpack.c.l.b16 %v82
  %v260 = vunpack.c.l.b16 %v83
  %v261 = vpack.c.b16 %v257, %v256
  %v262 = vpack.c.b16 %v259, %v258
  %v263 = vpack.c.b16 %v260, %v260
  %vm266 = vcmask 293888
  %v268 = vsel %vm266, %v219, 0
  %v271 = vsel %vm266, %v220, 0
  %v274 = vsel %vm266, %v221, 0
  %v277 = vsel %vm266, %v222, 0
  %v280 = vsel %vm266, %v223, 0
  %v283 = vsel %vm266, %v224, 0
  %v286 = vsel %vm266, %v225, 0
  %v289 = vsel %vm266, %v226, 0
  %v292 = vsel %vm266, %v227, 0
  %v295 = vsel %vm266, %v228, 0
  %v298 = vsel %vm266, %v229, 0
  %v301 = vsel %vm266, %v230, 0
  %v304 = vsel %vm266, %v231, 0
  %v307 = vsel %vm266, %v232, 0
  %v310 = vsel %vm266, %v233, 0
  %v313 = vsel %vm266, %v234, 0
  %v316 = vsel %vm266, %v235, 0
  %v319 = vsel %vm266, %v236, 0
  %v322 = vsel %vm266, %v237, 0
  %v325 = vsel %vm266, %v238, 0
  %v328 = vsel %vm266, %v239, 0
  %v331 = vsel %vm266, %v240, 0
  %v334 = vsel %vm266, %v241, 0
  %v337 = vsel %vm266, %v242, 0
  %v340 = vsel %vm266, %v243, 0
  %v343 = vsel %vm266, %v244, 0
  %v346 = vsel %vm266, %v245, 0
  %v349 = vsel %vm266, %v246, 0
  %v352 = vsel %vm266, %v247, 0
  %v355 = vsel %vm266, %v248, 0
  %v358 = vsel %vm266, %v249, 0
  %v361 = vsel %vm266, %v250, 0
  %vm363 = vcmask 1041408
  %v365 = vsel %vm363, %v263, 0
  %367 = vmatprep.subr.bf16.mxu0 0
  %368 = vmatpush1.bf16.msra.mxu0 0
  %369 = vmatprep.subr.bf16.mxu0 0
  %370 = vmatpush1.bf16.msra.mxu0 0
  %371 = vmatprep.subr.bf16.mxu0 0
  %372 = vmatpush1.bf16.msra.mxu0 0
  %373 = vmatprep.subr.bf16.mxu0 0
  %374 = vmatpush1.bf16.msra.mxu0 0
  %375 = vmatprep.subr.bf16.mxu0 0
  %376 = vmatpush1.bf16.msra.mxu0 0
  %377 = vmatprep.subr.bf16.mxu0 0
  %378 = vmatpush1.bf16.msra.mxu0 %v365
  %379 = vmatprep.subr.bf16.mxu0 0
  %380 = vmatpush1.bf16.msra.mxu0 %v262
  %381 = vmatprep.subr.bf16.mxu0 0
  %382 = vmatpush1.bf16.msra.mxu0 %v261
  %383 = vmatprep.subr.bf16.mxu0 0
  %384 = vmatpush2.bf16.msra.mxu0 0
  %385 = vmatprep.subr.bf16.mxu0 0
  %386 = vmatpush2.bf16.msra.mxu0 0
  %387 = vmatprep.subr.bf16.mxu0 0
  %388 = vmatpush2.bf16.msra.mxu0 0
  %389 = vmatprep.subr.bf16.mxu0 0
  %390 = vmatpush2.bf16.msra.mxu0 0
  %391 = vmatprep.subr.bf16.mxu0 0
  %392 = vmatpush2.bf16.msra.mxu0 0
  %393 = vmatprep.subr.bf16.mxu0 0
  %394 = vmatpush2.bf16.msra.mxu0 0
  %395 = vmatprep.subr.bf16.mxu0 0
  %396 = vmatpush2.bf16.msra.mxu0 0
  %397 = vmatprep.subr.bf16.mxu0 0
  %398 = vmatpush2.bf16.msra.mxu0 0
  %399 = vmatprep.mubr.bf16.mxu0 0
  %400 = vmatmul.mubr.bf16.gmra.mxu0 %v268
  %v401 = vpop.f32.mrf.mxu0
  %v402 = vadd.f32 %v89, %v401
  %v403 = vpop.f32.mrf.mxu0
  %v404 = vpop.f32.mrf.mxu0
  %v405 = vadd.f32 %v89, %v404
  %v406 = vpop.f32.mrf.mxu0
  %407 = vmatprep.mubr.bf16.mxu0 0
  %408 = vmatmul.mubr.bf16.gmra.mxu0 %v271
  %v409 = vpop.f32.mrf.mxu0
  %v410 = vadd.f32 %v89, %v409
  %v411 = vpop.f32.mrf.mxu0
  %v412 = vpop.f32.mrf.mxu0
  %v413 = vadd.f32 %v89, %v412
  %v414 = vpop.f32.mrf.mxu0
  %415 = vmatprep.mubr.bf16.mxu0 0
  %416 = vmatmul.mubr.bf16.gmra.mxu0 %v274
  %v417 = vpop.f32.mrf.mxu0
  %v418 = vadd.f32 %v89, %v417
  %v419 = vpop.f32.mrf.mxu0
  %v420 = vpop.f32.mrf.mxu0
  %v421 = vadd.f32 %v89, %v420
  %v422 = vpop.f32.mrf.mxu0
  %423 = vmatprep.mubr.bf16.mxu0 0
  %424 = vmatmul.mubr.bf16.gmra.mxu0 %v277
  %v425 = vpop.f32.mrf.mxu0
  %v426 = vadd.f32 %v89, %v425
  %v427 = vpop.f32.mrf.mxu0
  %v428 = vpop.f32.mrf.mxu0
  %v429 = vadd.f32 %v89, %v428
  %v430 = vpop.f32.mrf.mxu0
  %431 = vmatprep.mubr.bf16.mxu0 0
  %432 = vmatmul.mubr.bf16.gmra.mxu0 %v280
  %v433 = vpop.f32.mrf.mxu0
  %v434 = vadd.f32 %v89, %v433
  %v435 = vpop.f32.mrf.mxu0
  %v436 = vpop.f32.mrf.mxu0
  %v437 = vadd.f32 %v89, %v436
  %v438 = vpop.f32.mrf.mxu0
  %439 = vmatprep.mubr.bf16.mxu0 0
  %440 = vmatmul.mubr.bf16.gmra.mxu0 %v283
  %v441 = vpop.f32.mrf.mxu0
  %v442 = vadd.f32 %v89, %v441
  %v443 = vpop.f32.mrf.mxu0
  %v444 = vpop.f32.mrf.mxu0
  %v445 = vadd.f32 %v89, %v444
  %v446 = vpop.f32.mrf.mxu0
  %447 = vmatprep.mubr.bf16.mxu0 0
  %448 = vmatmul.mubr.bf16.gmra.mxu0 %v286
  %v449 = vpop.f32.mrf.mxu0
  %v450 = vadd.f32 %v89, %v449
  %v451 = vpop.f32.mrf.mxu0
  %v452 = vpop.f32.mrf.mxu0
  %v453 = vadd.f32 %v89, %v452
  %v454 = vpop.f32.mrf.mxu0
  %455 = vmatprep.mubr.bf16.mxu0 0
  %456 = vmatmul.mubr.bf16.gmra.mxu0 %v289
  %v457 = vpop.f32.mrf.mxu0
  %v458 = vadd.f32 %v89, %v457
  %v459 = vpop.f32.mrf.mxu0
  %v460 = vpop.f32.mrf.mxu0
  %v461 = vadd.f32 %v89, %v460
  %v462 = vpop.f32.mrf.mxu0
  %463 = vmatprep.mubr.bf16.mxu0 0
  %464 = vmatmul.mubr.bf16.gmra.mxu0 %v292
  %v465 = vpop.f32.mrf.mxu0
  %v466 = vadd.f32 %v89, %v465
  %v467 = vpop.f32.mrf.mxu0
  %v468 = vpop.f32.mrf.mxu0
  %v469 = vadd.f32 %v89, %v468
  %v470 = vpop.f32.mrf.mxu0
  %471 = vmatprep.mubr.bf16.mxu0 0
  %472 = vmatmul.mubr.bf16.gmra.mxu0 %v295
  %v473 = vpop.f32.mrf.mxu0
  %v474 = vadd.f32 %v89, %v473
  %v475 = vpop.f32.mrf.mxu0
  %v476 = vpop.f32.mrf.mxu0
  %v477 = vadd.f32 %v89, %v476
  %v478 = vpop.f32.mrf.mxu0
  %479 = vmatprep.mubr.bf16.mxu0 0
  %480 = vmatmul.mubr.bf16.gmra.mxu0 %v298
  %v481 = vpop.f32.mrf.mxu0
  %v482 = vadd.f32 %v89, %v481
  %v483 = vpop.f32.mrf.mxu0
  %v484 = vpop.f32.mrf.mxu0
  %v485 = vadd.f32 %v89, %v484
  %v486 = vpop.f32.mrf.mxu0
  %487 = vmatprep.mubr.bf16.mxu0 0
  %488 = vmatmul.mubr.bf16.gmra.mxu0 %v301
  %v489 = vpop.f32.mrf.mxu0
  %v490 = vadd.f32 %v89, %v489
  %v491 = vpop.f32.mrf.mxu0
  %v492 = vpop.f32.mrf.mxu0
  %v493 = vadd.f32 %v89, %v492
  %v494 = vpop.f32.mrf.mxu0
  %495 = vmatprep.mubr.bf16.mxu0 0
  %496 = vmatmul.mubr.bf16.gmra.mxu0 %v304
  %v497 = vpop.f32.mrf.mxu0
  %v498 = vadd.f32 %v89, %v497
  %v499 = vpop.f32.mrf.mxu0
  %v500 = vpop.f32.mrf.mxu0
  %v501 = vadd.f32 %v89, %v500
  %v502 = vpop.f32.mrf.mxu0
  %503 = vmatprep.mubr.bf16.mxu0 0
  %504 = vmatmul.mubr.bf16.gmra.mxu0 %v307
  %v505 = vpop.f32.mrf.mxu0
  %v506 = vadd.f32 %v89, %v505
  %v507 = vpop.f32.mrf.mxu0
  %v508 = vpop.f32.mrf.mxu0
  %v509 = vadd.f32 %v89, %v508
  %v510 = vpop.f32.mrf.mxu0
  %511 = vmatprep.mubr.bf16.mxu0 0
  %512 = vmatmul.mubr.bf16.gmra.mxu0 %v310
  %v513 = vpop.f32.mrf.mxu0
  %v514 = vadd.f32 %v89, %v513
  %v515 = vpop.f32.mrf.mxu0
  %v516 = vpop.f32.mrf.mxu0
  %v517 = vadd.f32 %v89, %v516
  %v518 = vpop.f32.mrf.mxu0
  %519 = vmatprep.mubr.bf16.mxu0 0
  %520 = vmatmul.mubr.bf16.gmra.mxu0 %v313
  %v521 = vpop.f32.mrf.mxu0
  %v522 = vadd.f32 %v89, %v521
  %v523 = vpop.f32.mrf.mxu0
  %v524 = vpop.f32.mrf.mxu0
  %v525 = vadd.f32 %v89, %v524
  %v526 = vpop.f32.mrf.mxu0
  %527 = vmatprep.mubr.bf16.mxu0 0
  %528 = vmatmul.mubr.bf16.gmra.mxu0 %v316
  %v529 = vpop.f32.mrf.mxu0
  %v530 = vadd.f32 %v89, %v529
  %v531 = vpop.f32.mrf.mxu0
  %v532 = vpop.f32.mrf.mxu0
  %v533 = vadd.f32 %v89, %v532
  %v534 = vpop.f32.mrf.mxu0
  %535 = vmatprep.mubr.bf16.mxu0 0
  %536 = vmatmul.mubr.bf16.gmra.mxu0 %v319
  %v537 = vpop.f32.mrf.mxu0
  %v538 = vadd.f32 %v89, %v537
  %v539 = vpop.f32.mrf.mxu0
  %v540 = vpop.f32.mrf.mxu0
  %v541 = vadd.f32 %v89, %v540
  %v542 = vpop.f32.mrf.mxu0
  %543 = vmatprep.mubr.bf16.mxu0 0
  %544 = vmatmul.mubr.bf16.gmra.mxu0 %v322
  %v545 = vpop.f32.mrf.mxu0
  %v546 = vadd.f32 %v89, %v545
  %v547 = vpop.f32.mrf.mxu0
  %v548 = vpop.f32.mrf.mxu0
  %v549 = vadd.f32 %v89, %v548
  %v550 = vpop.f32.mrf.mxu0
  %551 = vmatprep.mubr.bf16.mxu0 0
  %552 = vmatmul.mubr.bf16.gmra.mxu0 %v325
  %v553 = vpop.f32.mrf.mxu0
  %v554 = vadd.f32 %v89, %v553
  %v555 = vpop.f32.mrf.mxu0
  %v556 = vpop.f32.mrf.mxu0
  %v557 = vadd.f32 %v89, %v556
  %v558 = vpop.f32.mrf.mxu0
  %559 = vmatprep.mubr.bf16.mxu0 0
  %560 = vmatmul.mubr.bf16.gmra.mxu0 %v328
  %v561 = vpop.f32.mrf.mxu0
  %v562 = vadd.f32 %v89, %v561
  %v563 = vpop.f32.mrf.mxu0
  %v564 = vpop.f32.mrf.mxu0
  %v565 = vadd.f32 %v89, %v564
  %v566 = vpop.f32.mrf.mxu0
  %567 = vmatprep.mubr.bf16.mxu0 0
  %568 = vmatmul.mubr.bf16.gmra.mxu0 %v331
  %v569 = vpop.f32.mrf.mxu0
  %v570 = vadd.f32 %v89, %v569
  %v571 = vpop.f32.mrf.mxu0
  %v572 = vpop.f32.mrf.mxu0
  %v573 = vadd.f32 %v89, %v572
  %v574 = vpop.f32.mrf.mxu0
  %575 = vmatprep.mubr.bf16.mxu0 0
  %576 = vmatmul.mubr.bf16.gmra.mxu0 %v334
  %v577 = vpop.f32.mrf.mxu0
  %v578 = vadd.f32 %v89, %v577
  %v579 = vpop.f32.mrf.mxu0
  %v580 = vpop.f32.mrf.mxu0
  %v581 = vadd.f32 %v89, %v580
  %v582 = vpop.f32.mrf.mxu0
  %583 = vmatprep.mubr.bf16.mxu0 0
  %584 = vmatmul.mubr.bf16.gmra.mxu0 %v337
  %v585 = vpop.f32.mrf.mxu0
  %v586 = vadd.f32 %v89, %v585
  %v587 = vpop.f32.mrf.mxu0
  %v588 = vpop.f32.mrf.mxu0
  %v589 = vadd.f32 %v89, %v588
  %v590 = vpop.f32.mrf.mxu0
  %591 = vmatprep.mubr.bf16.mxu0 0
  %592 = vmatmul.mubr.bf16.gmra.mxu0 %v340
  %v593 = vpop.f32.mrf.mxu0
  %v594 = vadd.f32 %v89, %v593
  %v595 = vpop.f32.mrf.mxu0
  %v596 = vpop.f32.mrf.mxu0
  %v597 = vadd.f32 %v89, %v596
  %v598 = vpop.f32.mrf.mxu0
  %599 = vmatprep.mubr.bf16.mxu0 0
  %600 = vmatmul.mubr.bf16.gmra.mxu0 %v343
  %v601 = vpop.f32.mrf.mxu0
  %v602 = vadd.f32 %v89, %v601
  %v603 = vpop.f32.mrf.mxu0
  %v604 = vpop.f32.mrf.mxu0
  %v605 = vadd.f32 %v89, %v604
  %v606 = vpop.f32.mrf.mxu0
  %607 = vmatprep.mubr.bf16.mxu0 0
  %608 = vmatmul.mubr.bf16.gmra.mxu0 %v346
  %v609 = vpop.f32.mrf.mxu0
  %v610 = vadd.f32 %v89, %v609
  %v611 = vpop.f32.mrf.mxu0
  %v612 = vpop.f32.mrf.mxu0
  %v613 = vadd.f32 %v89, %v612
  %v614 = vpop.f32.mrf.mxu0
  %615 = vmatprep.mubr.bf16.mxu0 0
  %616 = vmatmul.mubr.bf16.gmra.mxu0 %v349
  %v617 = vpop.f32.mrf.mxu0
  %v618 = vadd.f32 %v89, %v617
  %v619 = vpop.f32.mrf.mxu0
  %v620 = vpop.f32.mrf.mxu0
  %v621 = vadd.f32 %v89, %v620
  %v622 = vpop.f32.mrf.mxu0
  %623 = vmatprep.mubr.bf16.mxu0 0
  %624 = vmatmul.mubr.bf16.gmra.mxu0 %v352
  %v625 = vpop.f32.mrf.mxu0
  %v626 = vadd.f32 %v89, %v625
  %v627 = vpop.f32.mrf.mxu0
  %v628 = vpop.f32.mrf.mxu0
  %v629 = vadd.f32 %v89, %v628
  %v630 = vpop.f32.mrf.mxu0
  %631 = vmatprep.mubr.bf16.mxu0 0
  %632 = vmatmul.mubr.bf16.gmra.mxu0 %v355
  %v633 = vpop.f32.mrf.mxu0
  %v634 = vadd.f32 %v89, %v633
  %v635 = vpop.f32.mrf.mxu0
  %v636 = vpop.f32.mrf.mxu0
  %v637 = vadd.f32 %v89, %v636
  %v638 = vpop.f32.mrf.mxu0
  %639 = vmatprep.mubr.bf16.mxu0 0
  %640 = vmatmul.mubr.bf16.gmra.mxu0 %v358
  %v641 = vpop.f32.mrf.mxu0
  %v642 = vadd.f32 %v89, %v641
  %v643 = vpop.f32.mrf.mxu0
  %v644 = vpop.f32.mrf.mxu0
  %v645 = vadd.f32 %v89, %v644
  %v646 = vpop.f32.mrf.mxu0
  %647 = vmatprep.mubr.bf16.mxu0 0
  %648 = vmatmul.mubr.bf16.gmra.mxu0 %v361
  %v649 = vpop.f32.mrf.mxu0
  %v650 = vadd.f32 %v89, %v649
  %v651 = vpop.f32.mrf.mxu0
  %v652 = vpop.f32.mrf.mxu0
  %v653 = vadd.f32 %v89, %v652
  %v654 = vpop.f32.mrf.mxu0
  %655 = vdwg.mxu0
  %v656 = vmax.f32 %v402, 0.0
  %v657 = vmax.f32 %v405, 0.0
  %v658 = vmax.f32 %v410, 0.0
  %v659 = vmax.f32 %v413, 0.0
  %v660 = vmax.f32 %v418, 0.0
  %v661 = vmax.f32 %v421, 0.0
  %v662 = vmax.f32 %v426, 0.0
  %v663 = vmax.f32 %v429, 0.0
  %v664 = vmax.f32 %v434, 0.0
  %v665 = vmax.f32 %v437, 0.0
  %v666 = vmax.f32 %v442, 0.0
  %v667 = vmax.f32 %v445, 0.0
  %v668 = vmax.f32 %v450, 0.0
  %v669 = vmax.f32 %v453, 0.0
  %v670 = vmax.f32 %v458, 0.0
  %v671 = vmax.f32 %v461, 0.0
  %v672 = vmax.f32 %v466, 0.0
  %v673 = vmax.f32 %v469, 0.0
  %v674 = vmax.f32 %v474, 0.0
  %v675 = vmax.f32 %v477, 0.0
  %v676 = vmax.f32 %v482, 0.0
  %v677 = vmax.f32 %v485, 0.0
  %v678 = vmax.f32 %v490, 0.0
  %v679 = vmax.f32 %v493, 0.0
  %v680 = vmax.f32 %v498, 0.0
  %v681 = vmax.f32 %v501, 0.0
  %v682 = vmax.f32 %v506, 0.0
  %v683 = vmax.f32 %v509, 0.0
  %v684 = vmax.f32 %v514, 0.0
  %v685 = vmax.f32 %v517, 0.0
  %v686 = vmax.f32 %v522, 0.0
  %v687 = vmax.f32 %v525, 0.0
  %v688 = vmax.f32 %v530, 0.0
  %v689 = vmax.f32 %v533, 0.0
  %v690 = vmax.f32 %v538, 0.0
  %v691 = vmax.f32 %v541, 0.0
  %v692 = vmax.f32 %v546, 0.0
  %v693 = vmax.f32 %v549, 0.0
  %v694 = vmax.f32 %v554, 0.0
  %v695 = vmax.f32 %v557, 0.0
  %v696 = vmax.f32 %v562, 0.0
  %v697 = vmax.f32 %v565, 0.0
  %v698 = vmax.f32 %v570, 0.0
  %v699 = vmax.f32 %v573, 0.0
  %v700 = vmax.f32 %v578, 0.0
  %v701 = vmax.f32 %v581, 0.0
  %v702 = vmax.f32 %v586, 0.0
  %v703 = vmax.f32 %v589, 0.0
  %v704 = vmax.f32 %v594, 0.0
  %v705 = vmax.f32 %v597, 0.0
  %v706 = vmax.f32 %v602, 0.0
  %v707 = vmax.f32 %v605, 0.0
  %v708 = vmax.f32 %v610, 0.0
  %v709 = vmax.f32 %v613, 0.0
  %v710 = vmax.f32 %v618, 0.0
  %v711 = vmax.f32 %v621, 0.0
  %v712 = vmax.f32 %v626, 0.0
  %v713 = vmax.f32 %v629, 0.0
  %v714 = vmax.f32 %v634, 0.0
  %v715 = vmax.f32 %v637, 0.0
  %v716 = vmax.f32 %v642, 0.0
  %v717 = vmax.f32 %v645, 0.0
  %v718 = vmax.f32 %v650, 0.0
  %v719 = vmax.f32 %v653, 0.0
  %v720 = vmax.f32 %v656, %v672
  %v721 = vmax.f32 %v657, %v673
  %v722 = vmax.f32 %v658, %v674
  %v723 = vmax.f32 %v659, %v675
  %v724 = vmax.f32 %v660, %v676
  %v725 = vmax.f32 %v661, %v677
  %v726 = vmax.f32 %v662, %v678
  %v727 = vmax.f32 %v663, %v679
  %v728 = vmax.f32 %v664, %v680
  %v729 = vmax.f32 %v665, %v681
  %v730 = vmax.f32 %v666, %v682
  %v731 = vmax.f32 %v667, %v683
  %v732 = vmax.f32 %v668, %v684
  %v733 = vmax.f32 %v669, %v685
  %v734 = vmax.f32 %v670, %v686
  %v735 = vmax.f32 %v671, %v687
  %v736 = vmax.f32 %v688, %v704
  %v737 = vmax.f32 %v689, %v705
  %v738 = vmax.f32 %v690, %v706
  %v739 = vmax.f32 %v691, %v707
  %v740 = vmax.f32 %v692, %v708
  %v741 = vmax.f32 %v693, %v709
  %v742 = vmax.f32 %v694, %v710
  %v743 = vmax.f32 %v695, %v711
  %v744 = vmax.f32 %v696, %v712
  %v745 = vmax.f32 %v697, %v713
  %v746 = vmax.f32 %v698, %v714
  %v747 = vmax.f32 %v699, %v715
  %v748 = vmax.f32 %v700, %v716
  %v749 = vmax.f32 %v701, %v717
  %v750 = vmax.f32 %v702, %v718
  %v751 = vmax.f32 %v703, %v719
  %v752 = vmax.f32 %v720, %v736
  %v753 = vmax.f32 %v721, %v737
  %v754 = vmax.f32 %v722, %v738
  %v755 = vmax.f32 %v723, %v739
  %v756 = vmax.f32 %v724, %v740
  %v757 = vmax.f32 %v725, %v741
  %v758 = vmax.f32 %v726, %v742
  %v759 = vmax.f32 %v727, %v743
  %v760 = vmax.f32 %v728, %v744
  %v761 = vmax.f32 %v729, %v745
  %v762 = vmax.f32 %v730, %v746
  %v763 = vmax.f32 %v731, %v747
  %v764 = vmax.f32 %v732, %v748
  %v765 = vmax.f32 %v733, %v749
  %v766 = vmax.f32 %v734, %v750
  %v767 = vmax.f32 %v735, %v751
  %vm768 = vcmask 261120
  %769 = vst.msk [vmem:[%s3] sm:$0xff] %vm768, %v752
  %770 = vst.msk [vmem:[%s3 + $0x8] sm:$0xff] %vm768, %v753
  %771 = vst.msk [vmem:[%s3 + $0x10] sm:$0xff] %vm768, %v754
  %772 = vst.msk [vmem:[%s3 + $0x18] sm:$0xff] %vm768, %v755
  %773 = vst.msk [vmem:[%s3 + $0x20] sm:$0xff] %vm768, %v756
  %774 = vst.msk [vmem:[%s3 + $0x28] sm:$0xff] %vm768, %v757
  %775 = vst.msk [vmem:[%s3 + $0x30] sm:$0xff] %vm768, %v758
  %776 = vst.msk [vmem:[%s3 + $0x38] sm:$0xff] %vm768, %v759
  %777 = vst.msk [vmem:[%s3 + $0x40] sm:$0xff] %vm768, %v760
  %778 = vst.msk [vmem:[%s3 + $0x48] sm:$0xff] %vm768, %v761
  %779 = vst.msk [vmem:[%s3 + $0x50] sm:$0xff] %vm768, %v762
  %780 = vst.msk [vmem:[%s3 + $0x58] sm:$0xff] %vm768, %v763
  %781 = vst.msk [vmem:[%s3 + $0x60] sm:$0xff] %vm768, %v764
  %782 = vst.msk [vmem:[%s3 + $0x68] sm:$0xff] %vm768, %v765
  %783 = vst.msk [vmem:[%s3 + $0x70] sm:$0xff] %vm768, %v766
  %784 = vst.msk [vmem:[%s3 + $0x78] sm:$0xff] %vm768, %v767
  // Predicated region
  $region14: #{vgg_forward.2} parent=0 // pred_check
    _
  $region15: #{vgg_forward.2} parent=0 // pred_check_branch
    %786 = sbr.rel (0) target = $region17
  $region16: #{vgg_forward.2} parent=0 // pred_region
    _
  $region17: #{vgg_forward.2} parent=0 // pred_fallthru
    _
  // Predicated region
  $region18: #{vgg_forward.2} parent=0 // pred_check
    _
  $region19: #{vgg_forward.2} parent=0 // pred_check_branch
    %788 = sbr.rel (0) target = $region21
  $region20: #{vgg_forward.2} parent=0 // pred_region
    _
  $region21: #{vgg_forward.2} parent=0 // pred_fallthru
    _

// kernel: vgg_forward.3
$region0: #{vgg_forward.3}
  #allocation0 [shape = 'u32[]', space=smem, size = 0x4, offset = 0x4, fixed_abs, tag = 'smem constant byte address 0x4 - core index']
  #allocation1 [shape = 'u32[144,128]{1,0:T(1,128)}', space=vmem, size = 0x12000, scoped, tag = 'internal scratch']
  %s0 = inlined_call_operand.vmem [shape: bf16[128,288], index: 0, kind: input, shape index: {}]
  %s1 = inlined_call_operand.vmem [shape: bf16[288,64], index: 1, kind: input, shape index: {}]
  %s2 = inlined_call_operand.vmem [shape: f32[1,64], index: 2, kind: input, shape index: {}]
  %s3 = inlined_call_operand.vmem [shape: bf16[4,64,256], index: 3, kind: input, shape index: {}]
  %s4 = inlined_call_operand.vmem [shape: f32[1,256], index: 4, kind: input, shape index: {}]
  %s5 = inlined_call_operand.vmem [shape: bf16[256,256], index: 5, kind: input, shape index: {}]
  %s6 = inlined_call_operand.vmem [shape: f32[1,256], index: 6, kind: input, shape index: {}]
  %s7 = inlined_call_operand.vmem [shape: bf16[256,10], index: 7, kind: input, shape index: {}]
  %s8 = inlined_call_operand.vmem [shape: f32[1,10], index: 8, kind: input, shape index: {}]
  %s9 = inlined_call_operand.hbm [shape: f32[2,10], index: 9, kind: output, shape index: {}]
  %s10 = sld [smem:[#allocation0]]
  $region46: #{vgg_forward.3} parent=0
    _
  %s12 = ssub.s32 1, %s10
  %s13 = scalar_select 0, %s12, %s10
  $region1: #{vgg_forward.3} parent=0
    #allocation2 [shape = 'u8[1024]{0}', space=vmem, size = 0x400, scoped, tag = 'output window, operand 0, single buffered']
    #allocation3 [shape = 's32[1]{0}', space=sflag, size = 0x4, scoped, tag = 'scoped memory for vgg_forward.3']
    %14 = vsyncpa [#allocation3], 0
    // Predicated region
    $region2: #{vgg_forward.3} parent=1 // pred_check
      _
    $region3: #{vgg_forward.3} parent=1 // pred_check_branch
      %16 = sbr.rel (0) target = $region5
    $region4: #{vgg_forward.3} parent=1 // pred_region
      _
    $region5: #{vgg_forward.3} parent=1 // pred_fallthru
      _
    // Predicated region
    $region6: #{vgg_forward.3} parent=1 // pred_check
      _
    $region7: #{vgg_forward.3} parent=1 // pred_check_branch
      %18 = sbr.rel (0) target = $region9
    $region8: #{vgg_forward.3} parent=1 // pred_region
      _
    $region9: #{vgg_forward.3} parent=1 // pred_fallthru
      _
    // Predicated region
    $region10: #{vgg_forward.3} parent=1 // pred_check
      _
    $region11: #{vgg_forward.3} parent=1 // pred_check_branch
      %20 = sbr.rel (0) target = $region13
    $region12: #{vgg_forward.3} parent=1 // pred_region
      _
    $region13: #{vgg_forward.3} parent=1 // pred_fallthru
      _
    // Predicated region
    $region14: #{vgg_forward.3} parent=1 // pred_check
      _
    $region15: #{vgg_forward.3} parent=1 // pred_check_branch
      %22 = sbr.rel (0) target = $region17
    $region16: #{vgg_forward.3} parent=1 // pred_region
      _
    $region17: #{vgg_forward.3} parent=1 // pred_fallthru
      _
    // Predicated region
    $region18: #{vgg_forward.3} parent=1 // pred_check
      _
    $region19: #{vgg_forward.3} parent=1 // pred_check_branch
      %24 = sbr.rel (0) target = $region21
    $region20: #{vgg_forward.3} parent=1 // pred_region
      _
    $region21: #{vgg_forward.3} parent=1 // pred_fallthru
      _
    // Predicated region
    $region22: #{vgg_forward.3} parent=1 // pred_check
      _
    $region23: #{vgg_forward.3} parent=1 // pred_check_branch
      %26 = sbr.rel (0) target = $region25
    $region24: #{vgg_forward.3} parent=1 // pred_region
      _
    $region25: #{vgg_forward.3} parent=1 // pred_fallthru
      _
    // Predicated region
    $region26: #{vgg_forward.3} parent=1 // pred_check
      _
    $region27: #{vgg_forward.3} parent=1 // pred_check_branch
      %28 = sbr.rel (0) target = $region29
    $region28: #{vgg_forward.3} parent=1 // pred_region
      _
    $region29: #{vgg_forward.3} parent=1 // pred_fallthru
      _
    // Predicated region
    $region30: #{vgg_forward.3} parent=1 // pred_check
      _
    $region31: #{vgg_forward.3} parent=1 // pred_check_branch
      %30 = sbr.rel (0) target = $region33
    $region32: #{vgg_forward.3} parent=1 // pred_region
      _
    $region33: #{vgg_forward.3} parent=1 // pred_fallthru
      _
    // Predicated region
    $region34: #{vgg_forward.3} parent=1 // pred_check
      _
    $region35: #{vgg_forward.3} parent=1 // pred_check_branch
      %32 = sbr.rel (0) target = $region37
    $region36: #{vgg_forward.3} parent=1 // pred_region
      _
    $region37: #{vgg_forward.3} parent=1 // pred_fallthru
      _
    %v34 = vld [vmem:[%s0] sm:$0xff]
    %v35 = vld [vmem:[%s0 + $0x8] sm:$0xf]
    %v36 = vld [vmem:[%s0 + $0xc] sm:$0xff]
    %v37 = vld [vmem:[%s0 + $0x14] sm:$0xf]
    %v38 = vld [vmem:[%s0 + $0x18] sm:$0xff]
    %v39 = vld [vmem:[%s0 + $0x20] sm:$0xf]
    %v40 = vld [vmem:[%s0 + $0x24] sm:$0xff]
    %v41 = vld [vmem:[%s0 + $0x2c] sm:$0xf]
    %v42 = vld [vmem:[%s0 + $0x30] sm:$0xff]
    %v43 = vld [vmem:[%s0 + $0x38] sm:$0xf]
    %v44 = vld [vmem:[%s0 + $0x3c] sm:$0xff]
    %v45 = vld [vmem:[%s0 + $0x44] sm:$0xf]
    %v46 = vld [vmem:[%s0 + $0x48] sm:$0xff]
    %v47 = vld [vmem:[%s0 + $0x50] sm:$0xf]
    %v48 = vld [vmem:[%s0 + $0x54] sm:$0xff]
    %v49 = vld [vmem:[%s0 + $0x5c] sm:$0xf]
    %v50 = vld [vmem:[%s0 + $0x60] sm:$0xff]
    %v51 = vld [vmem:[%s0 + $0x68] sm:$0xf]
    %v52 = vld [vmem:[%s0 + $0x6c] sm:$0xff]
    %v53 = vld [vmem:[%s0 + $0x74] sm:$0xf]
    %v54 = vld [vmem:[%s0 + $0x78] sm:$0xff]
    %v55 = vld [vmem:[%s0 + $0x80] sm:$0xf]
    %v56 = vld [vmem:[%s0 + $0x84] sm:$0xff]
    %v57 = vld [vmem:[%s0 + $0x8c] sm:$0xf]
    %v58 = vld [vmem:[%s0 + $0x90] sm:$0xff]
    %v59 = vld [vmem:[%s0 + $0x98] sm:$0xf]
    %v60 = vld [vmem:[%s0 + $0x9c] sm:$0xff]
    %v61 = vld [vmem:[%s0 + $0xa4] sm:$0xf]
    %v62 = vld [vmem:[%s0 + $0xa8] sm:$0xff]
    %v63 = vld [vmem:[%s0 + $0xb0] sm:$0xf]
    %v64 = vld [vmem:[%s0 + $0xb4] sm:$0xff]
    %v65 = vld [vmem:[%s0 + $0xbc] sm:$0xf]
    %v66 = vld [vmem:[%s1] sm:$0xf]
    %v67 = vld [vmem:[%s1 + $0x4] sm:$0xf]
    %v68 = vld [vmem:[%s1 + $0x8] sm:$0xf]
    %v69 = vld [vmem:[%s1 + $0xc] sm:$0xf]
    %v70 = vld [vmem:[%s1 + $0x10] sm:$0xf]
    %v71 = vld [vmem:[%s1 + $0x14] sm:$0xf]
    %v72 = vld [vmem:[%s1 + $0x18] sm:$0xf]
    %v73 = vld [vmem:[%s1 + $0x1c] sm:$0xf]
    %v74 = vld [vmem:[%s1 + $0x20] sm:$0xf]
    %v75 = vld [vmem:[%s1 + $0x24] sm:$0xf]
    %v76 = vld [vmem:[%s1 + $0x28] sm:$0xf]
    %v77 = vld [vmem:[%s1 + $0x2c] sm:$0xf]
    %v78 = vld [vmem:[%s1 + $0x30] sm:$0xf]
    %v79 = vld [vmem:[%s1 + $0x34] sm:$0xf]
    %v80 = vld [vmem:[%s1 + $0x38] sm:$0xf]
    %v81 = vld [vmem:[%s1 + $0x3c] sm:$0xf]
    %v82 = vld [vmem:[%s1 + $0x40] sm:$0xf]
    %v83 = vld [vmem:[%s1 + $0x44] sm:$0xf]
    %v84 = vld [vmem:[%s1 + $0x48] sm:$0xf]
    %v85 = vld [vmem:[%s1 + $0x4c] sm:$0xf]
    %v86 = vld [vmem:[%s1 + $0x50] sm:$0xf]
    %v87 = vld [vmem:[%s1 + $0x54] sm:$0xf]
    %v88 = vld [vmem:[%s1 + $0x58] sm:$0xf]
    %v89 = vld [vmem:[%s1 + $0x5c] sm:$0xf]
    %v90 = vld [vmem:[%s1 + $0x60] sm:$0xf]
    %v91 = vld [vmem:[%s1 + $0x64] sm:$0xf]
    %v92 = vld [vmem:[%s1 + $0x68] sm:$0xf]
    %v93 = vld [vmem:[%s1 + $0x6c] sm:$0xf]
    %v94 = vld [vmem:[%s1 + $0x70] sm:$0xf]
    %v95 = vld [vmem:[%s1 + $0x74] sm:$0xf]
    %v96 = vld [vmem:[%s1 + $0x78] sm:$0xf]
    %v97 = vld [vmem:[%s1 + $0x7c] sm:$0xf]
    %v98 = vld [vmem:[%s1 + $0x80] sm:$0xf]
    %v99 = vld [vmem:[%s1 + $0x84] sm:$0xf]
    %v100 = vld [vmem:[%s1 + $0x88] sm:$0xf]
    %v101 = vld [vmem:[%s1 + $0x8c] sm:$0xf]
    %v102 = vld [vmem:[%s2] sm:$0x1]
    %v104 = vlaneseq
    %v105 = vshrl.u32 %v104, 7
    %v106 = vsub.s32 0, %v105
    %v107 = vrot.slane %v102, %v106
    %v141 = vunpack.c.l.b16 %v34
    %v142 = vunpack.c.h.b16 %v34
    %v143 = vunpack.c.l.b16 %v35
    %v144 = vunpack.c.l.b16 %v36
    %v145 = vunpack.c.h.b16 %v36
    %v146 = vunpack.c.l.b16 %v37
    %v147 = vunpack.c.l.b16 %v38
    %v148 = vunpack.c.h.b16 %v38
    %v149 = vunpack.c.l.b16 %v39
    %v150 = vunpack.c.l.b16 %v40
    %v151 = vunpack.c.h.b16 %v40
    %v152 = vunpack.c.l.b16 %v41
    %v153 = vunpack.c.l.b16 %v42
    %v154 = vunpack.c.h.b16 %v42
    %v155 = vunpack.c.l.b16 %v43
    %v156 = vunpack.c.l.b16 %v44
    %v157 = vunpack.c.h.b16 %v44
    %v158 = vunpack.c.l.b16 %v45
    %v159 = vunpack.c.l.b16 %v46
    %v160 = vunpack.c.h.b16 %v46
    %v161 = vunpack.c.l.b16 %v47
    %v162 = vunpack.c.l.b16 %v48
    %v163 = vunpack.c.h.b16 %v48
    %v164 = vunpack.c.l.b16 %v49
    %v165 = vunpack.c.l.b16 %v50
    %v166 = vunpack.c.h.b16 %v50
    %v167 = vunpack.c.l.b16 %v51
    %v168 = vunpack.c.l.b16 %v52
    %v169 = vunpack.c.h.b16 %v52
    %v170 = vunpack.c.l.b16 %v53
    %v171 = vunpack.c.l.b16 %v54
    %v172 = vunpack.c.h.b16 %v54
    %v173 = vunpack.c.l.b16 %v55
    %v174 = vunpack.c.l.b16 %v56
    %v175 = vunpack.c.h.b16 %v56
    %v176 = vunpack.c.l.b16 %v57
    %v177 = vunpack.c.l.b16 %v58
    %v178 = vunpack.c.h.b16 %v58
    %v179 = vunpack.c.l.b16 %v59
    %v180 = vunpack.c.l.b16 %v60
    %v181 = vunpack.c.h.b16 %v60
    %v182 = vunpack.c.l.b16 %v61
    %v183 = vunpack.c.l.b16 %v62
    %v184 = vunpack.c.h.b16 %v62
    %v185 = vunpack.c.l.b16 %v63
    %v186 = vunpack.c.l.b16 %v64
    %v187 = vunpack.c.h.b16 %v64
    %v188 = vunpack.c.l.b16 %v65
    %v189 = vpack.c.b16 %v144, %v141
    %v190 = vpack.c.b16 %v145, %v142
    %v191 = vpack.c.b16 %v146, %v143
    %v192 = vpack.c.b16 %v150, %v147
    %v193 = vpack.c.b16 %v151, %v148
    %v194 = vpack.c.b16 %v152, %v149
    %v195 = vpack.c.b16 %v156, %v153
    %v196 = vpack.c.b16 %v157, %v154
    %v197 = vpack.c.b16 %v158, %v155
    %v198 = vpack.c.b16 %v162, %v159
    %v199 = vpack.c.b16 %v163, %v160
    %v200 = vpack.c.b16 %v164, %v161
    %v201 = vpack.c.b16 %v168, %v165
    %v202 = vpack.c.b16 %v169, %v166
    %v203 = vpack.c.b16 %v170, %v167
    %v204 = vpack.c.b16 %v174, %v171
    %v205 = vpack.c.b16 %v175, %v172
    %v206 = vpack.c.b16 %v176, %v173
    %v207 = vpack.c.b16 %v180, %v177
    %v208 = vpack.c.b16 %v181, %v178
    %v209 = vpack.c.b16 %v182, %v179
    %v210 = vpack.c.b16 %v186, %v183
    %v211 = vpack.c.b16 %v187, %v184
    %v212 = vpack.c.b16 %v188, %v185
    %v265 = vunpack.c.l.b16 %v66
    %v266 = vunpack.c.l.b16 %v67
    %v267 = vunpack.c.l.b16 %v68
    %v268 = vunpack.c.l.b16 %v69
    %v269 = vunpack.c.l.b16 %v70
    %v270 = vunpack.c.l.b16 %v71
    %v271 = vunpack.c.l.b16 %v72
    %v272 = vunpack.c.l.b16 %v73
    %v273 = vunpack.c.l.b16 %v74
    %v274 = vunpack.c.l.b16 %v75
    %v275 = vunpack.c.l.b16 %v76
    %v276 = vunpack.c.l.b16 %v77
    %v277 = vunpack.c.l.b16 %v78
    %v278 = vunpack.c.l.b16 %v79
    %v279 = vunpack.c.l.b16 %v80
    %v280 = vunpack.c.l.b16 %v81
    %v281 = vunpack.c.l.b16 %v82
    %v282 = vunpack.c.l.b16 %v83
    %v283 = vunpack.c.l.b16 %v84
    %v284 = vunpack.c.l.b16 %v85
    %v285 = vunpack.c.l.b16 %v86
    %v286 = vunpack.c.l.b16 %v87
    %v287 = vunpack.c.l.b16 %v88
    %v288 = vunpack.c.l.b16 %v89
    %v289 = vunpack.c.l.b16 %v90
    %v290 = vunpack.c.l.b16 %v91
    %v291 = vunpack.c.l.b16 %v92
    %v292 = vunpack.c.l.b16 %v93
    %v293 = vunpack.c.l.b16 %v94
    %v294 = vunpack.c.l.b16 %v95
    %v295 = vunpack.c.l.b16 %v96
    %v296 = vunpack.c.l.b16 %v97
    %v297 = vunpack.c.l.b16 %v98
    %v298 = vunpack.c.l.b16 %v99
    %v299 = vunpack.c.l.b16 %v100
    %v300 = vunpack.c.l.b16 %v101
    %v301 = vpack.c.b16 %v266, %v265
    %v302 = vpack.c.b16 %v268, %v267
    %v303 = vpack.c.b16 %v270, %v269
    %v304 = vpack.c.b16 %v272, %v271
    %v305 = vpack.c.b16 %v274, %v273
    %v306 = vpack.c.b16 %v276, %v275
    %v307 = vpack.c.b16 %v278, %v277
    %v308 = vpack.c.b16 %v280, %v279
    %v309 = vpack.c.b16 %v282, %v281
    %v310 = vpack.c.b16 %v284, %v283
    %v311 = vpack.c.b16 %v286, %v285
    %v312 = vpack.c.b16 %v288, %v287
    %v313 = vpack.c.b16 %v290, %v289
    %v314 = vpack.c.b16 %v292, %v291
    %v315 = vpack.c.b16 %v294, %v293
    %v316 = vpack.c.b16 %v296, %v295
    %v317 = vpack.c.b16 %v298, %v297
    %v318 = vpack.c.b16 %v300, %v299
    %vm337 = vcmask 261120
    %v339 = vsel %vm337, %v191, 0
    %v342 = vsel %vm337, %v194, 0
    %v345 = vsel %vm337, %v197, 0
    %v348 = vsel %vm337, %v200, 0
    %v351 = vsel %vm337, %v203, 0
    %v354 = vsel %vm337, %v206, 0
    %v357 = vsel %vm337, %v209, 0
    %v360 = vsel %vm337, %v212, 0
    %362 = vmatprep.subr.bf16.mxu0 0
    %363 = vmatpush1.bf16.msra.mxu0 %v308
    %364 = vmatprep.subr.bf16.mxu0 0
    %365 = vmatpush1.bf16.msra.mxu0 %v307
    %366 = vmatprep.subr.bf16.mxu0 0
    %367 = vmatpush1.bf16.msra.mxu0 %v306
    %368 = vmatprep.subr.bf16.mxu0 0
    %369 = vmatpush1.bf16.msra.mxu0 %v305
    %370 = vmatprep.subr.bf16.mxu0 0
    %371 = vmatpush1.bf16.msra.mxu0 %v304
    %372 = vmatprep.subr.bf16.mxu0 0
    %373 = vmatpush1.bf16.msra.mxu0 %v303
    %374 = vmatprep.subr.bf16.mxu0 0
    %375 = vmatpush1.bf16.msra.mxu0 %v302
    %376 = vmatprep.subr.bf16.mxu0 0
    %377 = vmatpush1.bf16.msra.mxu0 %v301
    %378 = vmatprep.subr.bf16.mxu0 0
    %379 = vmatpush2.bf16.msra.mxu0 %v316
    %380 = vmatprep.subr.bf16.mxu0 0
    %381 = vmatpush2.bf16.msra.mxu0 %v315
    %382 = vmatprep.subr.bf16.mxu0 0
    %383 = vmatpush2.bf16.msra.mxu0 %v314
    %384 = vmatprep.subr.bf16.mxu0 0
    %385 = vmatpush2.bf16.msra.mxu0 %v313
    %386 = vmatprep.subr.bf16.mxu0 0
    %387 = vmatpush2.bf16.msra.mxu0 %v312
    %388 = vmatprep.subr.bf16.mxu0 0
    %389 = vmatpush2.bf16.msra.mxu0 %v311
    %390 = vmatprep.subr.bf16.mxu0 0
    %391 = vmatpush2.bf16.msra.mxu0 %v310
    %392 = vmatprep.subr.bf16.mxu0 0
    %393 = vmatpush2.bf16.msra.mxu0 %v309
    %394 = vmatprep.mubr.bf16.mxu0 %v190
    %395 = vmatmul.mubr.bf16.gmra.mxu0 %v189
    %v396 = vpop.f32.mrf.mxu0
    %v397 = vadd.f32 %v107, %v396
    %v398 = vpop.f32.mrf.mxu0
    %v399 = vpop.f32.mrf.mxu0
    %v400 = vadd.f32 %v107, %v399
    %v401 = vpop.f32.mrf.mxu0
    %402 = vmatprep.mubr.bf16.mxu0 %v193
    %403 = vmatmul.mubr.bf16.gmra.mxu0 %v192
    %v404 = vpop.f32.mrf.mxu0
    %v405 = vadd.f32 %v107, %v404
    %v406 = vpop.f32.mrf.mxu0
    %v407 = vpop.f32.mrf.mxu0
    %v408 = vadd.f32 %v107, %v407
    %v409 = vpop.f32.mrf.mxu0
    %410 = vmatprep.mubr.bf16.mxu0 %v196
    %411 = vmatmul.mubr.bf16.gmra.mxu0 %v195
    %v412 = vpop.f32.mrf.mxu0
    %v413 = vadd.f32 %v107, %v412
    %v414 = vpop.f32.mrf.mxu0
    %v415 = vpop.f32.mrf.mxu0
    %v416 = vadd.f32 %v107, %v415
    %v417 = vpop.f32.mrf.mxu0
    %418 = vmatprep.mubr.bf16.mxu0 %v199
    %419 = vmatmul.mubr.bf16.gmra.mxu0 %v198
    %v420 = vpop.f32.mrf.mxu0
    %v421 = vadd.f32 %v107, %v420
    %v422 = vpop.f32.mrf.mxu0
    %v423 = vpop.f32.mrf.mxu0
    %v424 = vadd.f32 %v107, %v423
    %v425 = vpop.f32.mrf.mxu0
    %426 = vmatprep.mubr.bf16.mxu0 %v202
    %427 = vmatmul.mubr.bf16.gmra.mxu0 %v201
    %v428 = vpop.f32.mrf.mxu0
    %v429 = vadd.f32 %v107, %v428
    %v430 = vpop.f32.mrf.mxu0
    %v431 = vpop.f32.mrf.mxu0
    %v432 = vadd.f32 %v107, %v431
    %v433 = vpop.f32.mrf.mxu0
    %434 = vmatprep.mubr.bf16.mxu0 %v205
    %435 = vmatmul.mubr.bf16.gmra.mxu0 %v204
    %v436 = vpop.f32.mrf.mxu0
    %v437 = vadd.f32 %v107, %v436
    %v438 = vpop.f32.mrf.mxu0
    %v439 = vpop.f32.mrf.mxu0
    %v440 = vadd.f32 %v107, %v439
    %v441 = vpop.f32.mrf.mxu0
    %442 = vmatprep.mubr.bf16.mxu0 %v208
    %443 = vmatmul.mubr.bf16.gmra.mxu0 %v207
    %v444 = vpop.f32.mrf.mxu0
    %v445 = vadd.f32 %v107, %v444
    %v446 = vpop.f32.mrf.mxu0
    %v447 = vpop.f32.mrf.mxu0
    %v448 = vadd.f32 %v107, %v447
    %v449 = vpop.f32.mrf.mxu0
    %450 = vmatprep.mubr.bf16.mxu0 %v211
    %451 = vmatmul.mubr.bf16.gmra.mxu0 %v210
    %v452 = vpop.f32.mrf.mxu0
    %v453 = vadd.f32 %v107, %v452
    %v454 = vpop.f32.mrf.mxu0
    %v455 = vpop.f32.mrf.mxu0
    %v456 = vadd.f32 %v107, %v455
    %v457 = vpop.f32.mrf.mxu0
    %458 = vdwg.mxu0
    %459 = vmatprep.subr.bf16.mxu0 0
    %460 = vmatpush1.bf16.msra.mxu0 0
    %461 = vmatprep.subr.bf16.mxu0 0
    %462 = vmatpush1.bf16.msra.mxu0 0
    %463 = vmatprep.subr.bf16.mxu0 0
    %464 = vmatpush1.bf16.msra.mxu0 0
    %465 = vmatprep.subr.bf16.mxu0 0
    %466 = vmatpush1.bf16.msra.mxu0 0
    %467 = vmatprep.subr.bf16.mxu0 0
    %468 = vmatpush1.bf16.msra.mxu0 0
    %469 = vmatprep.subr.bf16.mxu0 0
    %470 = vmatpush1.bf16.msra.mxu0 0
    %471 = vmatprep.subr.bf16.mxu0 0
    %472 = vmatpush1.bf16.msra.mxu0 %v318
    %473 = vmatprep.subr.bf16.mxu0 0
    %474 = vmatpush1.bf16.msra.mxu0 %v317
    %475 = vmatprep.subr.bf16.mxu0 0
    %476 = vmatpush2.bf16.msra.mxu0 0
    %477 = vmatprep.subr.bf16.mxu0 0
    %478 = vmatpush2.bf16.msra.mxu0 0
    %479 = vmatprep.subr.bf16.mxu0 0
    %480 = vmatpush2.bf16.msra.mxu0 0
    %481 = vmatprep.subr.bf16.mxu0 0
    %482 = vmatpush2.bf16.msra.mxu0 0
    %483 = vmatprep.subr.bf16.mxu0 0
    %484 = vmatpush2.bf16.msra.mxu0 0
    %485 = vmatprep.subr.bf16.mxu0 0
    %486 = vmatpush2.bf16.msra.mxu0 0
    %487 = vmatprep.subr.bf16.mxu0 0
    %488 = vmatpush2.bf16.msra.mxu0 0
    %489 = vmatprep.subr.bf16.mxu0 0
    %490 = vmatpush2.bf16.msra.mxu0 0
    %491 = vmatprep.mubr.bf16.mxu0 0
    %492 = vmatmul.mubr.bf16.gmra.mxu0 %v339
    %v493 = vpop.f32.mrf.mxu0
    %v494 = vadd.f32 %v397, %v493
    %v495 = vpop.f32.mrf.mxu0
    %v496 = vpop.f32.mrf.mxu0
    %v497 = vadd.f32 %v400, %v496
    %v498 = vpop.f32.mrf.mxu0
    %499 = vmatprep.mubr.bf16.mxu0 0
    %500 = vmatmul.mubr.bf16.gmra.mxu0 %v342
    %v501 = vpop.f32.mrf.mxu0
    %v502 = vadd.f32 %v405, %v501
    %v503 = vpop.f32.mrf.mxu0
    %v504 = vpop.f32.mrf.mxu0
    %v505 = vadd.f32 %v408, %v504
    %v506 = vpop.f32.mrf.mxu0
    %507 = vmatprep.mubr.bf16.mxu0 0
    %508 = vmatmul.mubr.bf16.gmra.mxu0 %v345
    %v509 = vpop.f32.mrf.mxu0
    %v510 = vadd.f32 %v413, %v509
    %v511 = vpop.f32.mrf.mxu0
    %v512 = vpop.f32.mrf.mxu0
    %v513 = vadd.f32 %v416, %v512
    %v514 = vpop.f32.mrf.mxu0
    %515 = vmatprep.mubr.bf16.mxu0 0
    %516 = vmatmul.mubr.bf16.gmra.mxu0 %v348
    %v517 = vpop.f32.mrf.mxu0
    %v518 = vadd.f32 %v421, %v517
    %v519 = vpop.f32.mrf.mxu0
    %v520 = vpop.f32.mrf.mxu0
    %v521 = vadd.f32 %v424, %v520
    %v522 = vpop.f32.mrf.mxu0
    %523 = vmatprep.mubr.bf16.mxu0 0
    %524 = vmatmul.mubr.bf16.gmra.mxu0 %v351
    %v525 = vpop.f32.mrf.mxu0
    %v526 = vadd.f32 %v429, %v525
    %v527 = vpop.f32.mrf.mxu0
    %v528 = vpop.f32.mrf.mxu0
    %v529 = vadd.f32 %v432, %v528
    %v530 = vpop.f32.mrf.mxu0
    %531 = vmatprep.mubr.bf16.mxu0 0
    %532 = vmatmul.mubr.bf16.gmra.mxu0 %v354
    %v533 = vpop.f32.mrf.mxu0
    %v534 = vadd.f32 %v437, %v533
    %v535 = vpop.f32.mrf.mxu0
    %v536 = vpop.f32.mrf.mxu0
    %v537 = vadd.f32 %v440, %v536
    %v538 = vpop.f32.mrf.mxu0
    %539 = vmatprep.mubr.bf16.mxu0 0
    %540 = vmatmul.mubr.bf16.gmra.mxu0 %v357
    %v541 = vpop.f32.mrf.mxu0
    %v542 = vadd.f32 %v445, %v541
    %v543 = vpop.f32.mrf.mxu0
    %v544 = vpop.f32.mrf.mxu0
    %v545 = vadd.f32 %v448, %v544
    %v546 = vpop.f32.mrf.mxu0
    %547 = vmatprep.mubr.bf16.mxu0 0
    %548 = vmatmul.mubr.bf16.gmra.mxu0 %v360
    %v549 = vpop.f32.mrf.mxu0
    %v550 = vadd.f32 %v453, %v549
    %v551 = vpop.f32.mrf.mxu0
    %v552 = vpop.f32.mrf.mxu0
    %v553 = vadd.f32 %v456, %v552
    %v554 = vpop.f32.mrf.mxu0
    %555 = vdwg.mxu0
    %v556 = vmax.f32 %v494, 0.0
    %v557 = vmax.f32 %v497, 0.0
    %v558 = vmax.f32 %v502, 0.0
    %v559 = vmax.f32 %v505, 0.0
    %v560 = vmax.f32 %v510, 0.0
    %v561 = vmax.f32 %v513, 0.0
    %v562 = vmax.f32 %v518, 0.0
    %v563 = vmax.f32 %v521, 0.0
    %v564 = vmax.f32 %v526, 0.0
    %v565 = vmax.f32 %v529, 0.0
    %v566 = vmax.f32 %v534, 0.0
    %v567 = vmax.f32 %v537, 0.0
    %v568 = vmax.f32 %v542, 0.0
    %v569 = vmax.f32 %v545, 0.0
    %v570 = vmax.f32 %v550, 0.0
    %v571 = vmax.f32 %v553, 0.0
    %v572 = vmax.f32 %v556, %v560
    %v573 = vmax.f32 %v557, %v561
    %v574 = vmax.f32 %v558, %v562
    %v575 = vmax.f32 %v559, %v563
    %v576 = vmax.f32 %v564, %v568
    %v577 = vmax.f32 %v565, %v569
    %v578 = vmax.f32 %v566, %v570
    %v579 = vmax.f32 %v567, %v571
    %v580 = vmax.f32 %v572, %v576
    %v581 = vmax.f32 %v573, %v577
    %v582 = vmax.f32 %v574, %v578
    %v583 = vmax.f32 %v575, %v579
    %v584 = vadd.f32 %v580, %v581
    %v585 = vadd.f32 %v584, %v582
    %v586 = vadd.f32 %v585, %v583
    %v587 = vmul.f32 %v586, 0.25
    %v588 = vpack.c.bf16 %v587, %v587
    %v589 = vld [vmem:[%s3] sm:$0xff]
    %v590 = vld [vmem:[%s3 + $0x8] sm:$0xff]
    %v591 = vld [vmem:[%s3 + $0x10] sm:$0xff]
    %v592 = vld [vmem:[%s3 + $0x18] sm:$0xff]
    %v593 = vld [vmem:[%s3 + $0x20] sm:$0xff]
    %v594 = vld [vmem:[%s3 + $0x28] sm:$0xff]
    %v595 = vld [vmem:[%s3 + $0x30] sm:$0xff]
    %v596 = vld [vmem:[%s3 + $0x38] sm:$0xff]
    %s597 = scalar_lea.vmem %s3, 64
    %v598 = vld [vmem:[%s597] sm:$0xff]
    %v599 = vld [vmem:[%s597 + $0x8] sm:$0xff]
    %v600 = vld [vmem:[%s597 + $0x10] sm:$0xff]
    %v601 = vld [vmem:[%s597 + $0x18] sm:$0xff]
    %v602 = vld [vmem:[%s597 + $0x20] sm:$0xff]
    %v603 = vld [vmem:[%s597 + $0x28] sm:$0xff]
    %v604 = vld [vmem:[%s597 + $0x30] sm:$0xff]
    %v605 = vld [vmem:[%s597 + $0x38] sm:$0xff]
    %v607 = vrot.slane %v588, 1
    %v616 = vunpack.c.l.b16 %v598
    %v617 = vunpack.c.h.b16 %v598
    %v618 = vunpack.c.l.b16 %v599
    %v619 = vunpack.c.h.b16 %v599
    %v620 = vunpack.c.l.b16 %v600
    %v621 = vunpack.c.h.b16 %v600
    %v622 = vunpack.c.l.b16 %v601
    %v623 = vunpack.c.h.b16 %v601
    %v624 = vunpack.c.l.b16 %v602
    %v625 = vunpack.c.h.b16 %v602
    %v626 = vunpack.c.l.b16 %v603
    %v627 = vunpack.c.h.b16 %v603
    %v628 = vunpack.c.l.b16 %v604
    %v629 = vunpack.c.h.b16 %v604
    %v630 = vunpack.c.l.b16 %v605
    %v631 = vunpack.c.h.b16 %v605
    %v632 = vpack.c.b16 %v618, %v616
    %v633 = vpack.c.b16 %v619, %v617
    %v634 = vpack.c.b16 %v622, %v620
    %v635 = vpack.c.b16 %v623, %v621
    %v636 = vpack.c.b16 %v626, %v624
    %v637 = vpack.c.b16 %v627, %v625
    %v638 = vpack.c.b16 %v630, %v628
    %v639 = vpack.c.b16 %v631, %v629
    %vm648 = vcmask 523264
    %v650 = vsel %vm648, %v607, 0
    %652 = vmatprep.subr.bf16.mxu0 0
    %653 = vmatpush1.bf16.msra.mxu0 0
    %654 = vmatprep.subr.bf16.mxu0 0
    %655 = vmatpush1.bf16.msra.mxu0 0
    %656 = vmatprep.subr.bf16.mxu0 0
    %657 = vmatpush1.bf16.msra.mxu0 0
    %658 = vmatprep.subr.bf16.mxu0 0
    %659 = vmatpush1.bf16.msra.mxu0 0
    %660 = vmatprep.subr.bf16.mxu0 %v639
    %661 = vmatpush1.bf16.msra.mxu0 %v638
    %662 = vmatprep.subr.bf16.mxu0 %v637
    %663 = vmatpush1.bf16.msra.mxu0 %v636
    %664 = vmatprep.subr.bf16.mxu0 %v635
    %665 = vmatpush1.bf16.msra.mxu0 %v634
    %666 = vmatprep.subr.bf16.mxu0 %v633
    %667 = vmatpush1.bf16.msra.mxu0 %v632
    %668 = vmatprep.subr.bf16.mxu0 0
    %669 = vmatpush2.bf16.msra.mxu0 0
    %670 = vmatprep.subr.bf16.mxu0 0
    %671 = vmatpush2.bf16.msra.mxu0 0
    %672 = vmatprep.subr.bf16.mxu0 0
    %673 = vmatpush2.bf16.msra.mxu0 0
    %674 = vmatprep.subr.bf16.mxu0 0
    %675 = vmatpush2.bf16.msra.mxu0 0
    %676 = vmatprep.subr.bf16.mxu0 0
    %677 = vmatpush2.bf16.msra.mxu0 0
    %678 = vmatprep.subr.bf16.mxu0 0
    %679 = vmatpush2.bf16.msra.mxu0 0
    %680 = vmatprep.subr.bf16.mxu0 0
    %681 = vmatpush2.bf16.msra.mxu0 0
    %682 = vmatprep.subr.bf16.mxu0 0
    %683 = vmatpush2.bf16.msra.mxu0 0
    %684 = vmatprep.mubr.bf16.mxu0 0
    %685 = vmatmul.mubr.bf16.gmra.mxu0 %v650
    %v686 = vpop.f32.mrf.mxu0
    %v687 = vadd.f32 0.0, %v686
    %v688 = vpop.f32.mrf.mxu0
    %v689 = vadd.f32 0.0, %v688
    %v690 = vpop.f32.mrf.mxu0
    %v691 = vpop.f32.mrf.mxu0
    %692 = vdwg.mxu0
    %v701 = vunpack.c.l.b16 %v589
    %v702 = vunpack.c.h.b16 %v589
    %v703 = vunpack.c.l.b16 %v590
    %v704 = vunpack.c.h.b16 %v590
    %v705 = vunpack.c.l.b16 %v591
    %v706 = vunpack.c.h.b16 %v591
    %v707 = vunpack.c.l.b16 %v592
    %v708 = vunpack.c.h.b16 %v592
    %v709 = vunpack.c.l.b16 %v593
    %v710 = vunpack.c.h.b16 %v593
    %v711 = vunpack.c.l.b16 %v594
    %v712 = vunpack.c.h.b16 %v594
    %v713 = vunpack.c.l.b16 %v595
    %v714 = vunpack.c.h.b16 %v595
    %v715 = vunpack.c.l.b16 %v596
    %v716 = vunpack.c.h.b16 %v596
    %v717 = vpack.c.b16 %v703, %v701
    %v718 = vpack.c.b16 %v704, %v702
    %v719 = vpack.c.b16 %v707, %v705
    %v720 = vpack.c.b16 %v708, %v706
    %v721 = vpack.c.b16 %v711, %v709
    %v722 = vpack.c.b16 %v712, %v710
    %v723 = vpack.c.b16 %v715, %v713
    %v724 = vpack.c.b16 %v716, %v714
    %v734 = vsel %vm648, %v588, 0
    %736 = vmatprep.subr.bf16.mxu0 0
    %737 = vmatpush1.bf16.msra.mxu0 0
    %738 = vmatprep.subr.bf16.mxu0 0
    %739 = vmatpush1.bf16.msra.mxu0 0
    %740 = vmatprep.subr.bf16.mxu0 0
    %741 = vmatpush1.bf16.msra.mxu0 0
    %742 = vmatprep.subr.bf16.mxu0 0
    %743 = vmatpush1.bf16.msra.mxu0 0
    %744 = vmatprep.subr.bf16.mxu0 %v724
    %745 = vmatpush1.bf16.msra.mxu0 %v723
    %746 = vmatprep.subr.bf16.mxu0 %v722
    %747 = vmatpush1.bf16.msra.mxu0 %v721
    %748 = vmatprep.subr.bf16.mxu0 %v720
    %749 = vmatpush1.bf16.msra.mxu0 %v719
    %750 = vmatprep.subr.bf16.mxu0 %v718
    %751 = vmatpush1.bf16.msra.mxu0 %v717
    %752 = vmatprep.subr.bf16.mxu0 0
    %753 = vmatpush2.bf16.msra.mxu0 0
    %754 = vmatprep.subr.bf16.mxu0 0
    %755 = vmatpush2.bf16.msra.mxu0 0
    %756 = vmatprep.subr.bf16.mxu0 0
    %757 = vmatpush2.bf16.msra.mxu0 0
    %758 = vmatprep.subr.bf16.mxu0 0
    %759 = vmatpush2.bf16.msra.mxu0 0
    %760 = vmatprep.subr.bf16.mxu0 0
    %761 = vmatpush2.bf16.msra.mxu0 0
    %762 = vmatprep.subr.bf16.mxu0 0
    %763 = vmatpush2.bf16.msra.mxu0 0
    %764 = vmatprep.subr.bf16.mxu0 0
    %765 = vmatpush2.bf16.msra.mxu0 0
    %766 = vmatprep.subr.bf16.mxu0 0
    %767 = vmatpush2.bf16.msra.mxu0 0
    %768 = vmatprep.mubr.bf16.mxu0 0
    %769 = vmatmul.mubr.bf16.gmra.mxu0 %v734
    %v770 = vpop.f32.mrf.mxu0
    %v771 = vadd.f32 %v687, %v770
    %v772 = vpop.f32.mrf.mxu0
    %v773 = vadd.f32 %v689, %v772
    %v774 = vpop.f32.mrf.mxu0
    %v775 = vpop.f32.mrf.mxu0
    %776 = vdwg.mxu0
    %s777 = scalar_lea.vmem %s3, 128
    %v778 = vld [vmem:[%s777] sm:$0xff]
    %v779 = vld [vmem:[%s777 + $0x8] sm:$0xff]
    %v780 = vld [vmem:[%s777 + $0x10] sm:$0xff]
    %v781 = vld [vmem:[%s777 + $0x18] sm:$0xff]
    %v782 = vld [vmem:[%s777 + $0x20] sm:$0xff]
    %v783 = vld [vmem:[%s777 + $0x28] sm:$0xff]
    %v784 = vld [vmem:[%s777 + $0x30] sm:$0xff]
    %v785 = vld [vmem:[%s777 + $0x38] sm:$0xff]
    %v786 = vrot.slane %v588, 2
    %v795 = vunpack.c.l.b16 %v778
    %v796 = vunpack.c.h.b16 %v778
    %v797 = vunpack.c.l.b16 %v779
    %v798 = vunpack.c.h.b16 %v779
    %v799 = vunpack.c.l.b16 %v780
    %v800 = vunpack.c.h.b16 %v780
    %v801 = vunpack.c.l.b16 %v781
    %v802 = vunpack.c.h.b16 %v781
    %v803 = vunpack.c.l.b16 %v782
    %v804 = vunpack.c.h.b16 %v782
    %v805 = vunpack.c.l.b16 %v783
    %v806 = vunpack.c.h.b16 %v783
    %v807 = vunpack.c.l.b16 %v784
    %v808 = vunpack.c.h.b16 %v784
    %v809 = vunpack.c.l.b16 %v785
    %v810 = vunpack.c.h.b16 %v785
    %v811 = vpack.c.b16 %v797, %v795
    %v812 = vpack.c.b16 %v798, %v796
    %v813 = vpack.c.b16 %v801, %v799
    %v814 = vpack.c.b16 %v802, %v800
    %v815 = vpack.c.b16 %v805, %v803
    %v816 = vpack.c.b16 %v806, %v804
    %v817 = vpack.c.b16 %v809, %v807
    %v818 = vpack.c.b16 %v810, %v808
    %v828 = vsel %vm648, %v786, 0
    %830 = vmatprep.subr.bf16.mxu0 0
    %831 = vmatpush1.bf16.msra.mxu0 0
    %832 = vmatprep.subr.bf16.mxu0 0
    %833 = vmatpush1.bf16.msra.mxu0 0
    %834 = vmatprep.subr.bf16.mxu0 0
    %835 = vmatpush1.bf16.msra.mxu0 0
    %836 = vmatprep.subr.bf16.mxu0 0
    %837 = vmatpush1.bf16.msra.mxu0 0
    %838 = vmatprep.subr.bf16.mxu0 %v818
    %839 = vmatpush1.bf16.msra.mxu0 %v817
    %840 = vmatprep.subr.bf16.mxu0 %v816
    %841 = vmatpush1.bf16.msra.mxu0 %v815
    %842 = vmatprep.subr.bf16.mxu0 %v814
    %843 = vmatpush1.bf16.msra.mxu0 %v813
    %844 = vmatprep.subr.bf16.mxu0 %v812
    %845 = vmatpush1.bf16.msra.mxu0 %v811
    %846 = vmatprep.subr.bf16.mxu0 0
    %847 = vmatpush2.bf16.msra.mxu0 0
    %848 = vmatprep.subr.bf16.mxu0 0
    %849 = vmatpush2.bf16.msra.mxu0 0
    %850 = vmatprep.subr.bf16.mxu0 0
    %851 = vmatpush2.bf16.msra.mxu0 0
    %852 = vmatprep.subr.bf16.mxu0 0
    %853 = vmatpush2.bf16.msra.mxu0 0
    %854 = vmatprep.subr.bf16.mxu0 0
    %855 = vmatpush2.bf16.msra.mxu0 0
    %856 = vmatprep.subr.bf16.mxu0 0
    %857 = vmatpush2.bf16.msra.mxu0 0
    %858 = vmatprep.subr.bf16.mxu0 0
    %859 = vmatpush2.bf16.msra.mxu0 0
    %860 = vmatprep.subr.bf16.mxu0 0
    %861 = vmatpush2.bf16.msra.mxu0 0
    %862 = vmatprep.mubr.bf16.mxu0 0
    %863 = vmatmul.mubr.bf16.gmra.mxu0 %v828
    %v864 = vpop.f32.mrf.mxu0
    %v865 = vadd.f32 0.0, %v864
    %v866 = vpop.f32.mrf.mxu0
    %v867 = vadd.f32 0.0, %v866
    %v868 = vpop.f32.mrf.mxu0
    %v869 = vpop.f32.mrf.mxu0
    %870 = vdwg.mxu0
    %v871 = vadd.f32 %v771, %v865
    %v872 = vadd.f32 %v773, %v867
    %s873 = scalar_lea.vmem %s3, 192
    %v874 = vld [vmem:[%s873] sm:$0xff]
    %v875 = vld [vmem:[%s873 + $0x8] sm:$0xff]
    %v876 = vld [vmem:[%s873 + $0x10] sm:$0xff]
    %v877 = vld [vmem:[%s873 + $0x18] sm:$0xff]
    %v878 = vld [vmem:[%s873 + $0x20] sm:$0xff]
    %v879 = vld [vmem:[%s873 + $0x28] sm:$0xff]
    %v880 = vld [vmem:[%s873 + $0x30] sm:$0xff]
    %v881 = vld [vmem:[%s873 + $0x38] sm:$0xff]
    %v882 = vrot.slane %v588, 3
    %v891 = vunpack.c.l.b16 %v874
    %v892 = vunpack.c.h.b16 %v874
    %v893 = vunpack.c.l.b16 %v875
    %v894 = vunpack.c.h.b16 %v875
    %v895 = vunpack.c.l.b16 %v876
    %v896 = vunpack.c.h.b16 %v876
    %v897 = vunpack.c.l.b16 %v877
    %v898 = vunpack.c.h.b16 %v877
    %v899 = vunpack.c.l.b16 %v878
    %v900 = vunpack.c.h.b16 %v878
    %v901 = vunpack.c.l.b16 %v879
    %v902 = vunpack.c.h.b16 %v879
    %v903 = vunpack.c.l.b16 %v880
    %v904 = vunpack.c.h.b16 %v880
    %v905 = vunpack.c.l.b16 %v881
    %v906 = vunpack.c.h.b16 %v881
    %v907 = vpack.c.b16 %v893, %v891
    %v908 = vpack.c.b16 %v894, %v892
    %v909 = vpack.c.b16 %v897, %v895
    %v910 = vpack.c.b16 %v898, %v896
    %v911 = vpack.c.b16 %v901, %v899
    %v912 = vpack.c.b16 %v902, %v900
    %v913 = vpack.c.b16 %v905, %v903
    %v914 = vpack.c.b16 %v906, %v904
    %v924 = vsel %vm648, %v882, 0
    %926 = vmatprep.subr.bf16.mxu0 0
    %927 = vmatpush1.bf16.msra.mxu0 0
    %928 = vmatprep.subr.bf16.mxu0 0
    %929 = vmatpush1.bf16.msra.mxu0 0
    %930 = vmatprep.subr.bf16.mxu0 0
    %931 = vmatpush1.bf16.msra.mxu0 0
    %932 = vmatprep.subr.bf16.mxu0 0
    %933 = vmatpush1.bf16.msra.mxu0 0
    %934 = vmatprep.subr.bf16.mxu0 %v914
    %935 = vmatpush1.bf16.msra.mxu0 %v913
    %936 = vmatprep.subr.bf16.mxu0 %v912
    %937 = vmatpush1.bf16.msra.mxu0 %v911
    %938 = vmatprep.subr.bf16.mxu0 %v910
    %939 = vmatpush1.bf16.msra.mxu0 %v909
    %940 = vmatprep.subr.bf16.mxu0 %v908
    %941 = vmatpush1.bf16.msra.mxu0 %v907
    %942 = vmatprep.subr.bf16.mxu0 0
    %943 = vmatpush2.bf16.msra.mxu0 0
    %944 = vmatprep.subr.bf16.mxu0 0
    %945 = vmatpush2.bf16.msra.mxu0 0
    %946 = vmatprep.subr.bf16.mxu0 0
    %947 = vmatpush2.bf16.msra.mxu0 0
    %948 = vmatprep.subr.bf16.mxu0 0
    %949 = vmatpush2.bf16.msra.mxu0 0
    %950 = vmatprep.subr.bf16.mxu0 0
    %951 = vmatpush2.bf16.msra.mxu0 0
    %952 = vmatprep.subr.bf16.mxu0 0
    %953 = vmatpush2.bf16.msra.mxu0 0
    %954 = vmatprep.subr.bf16.mxu0 0
    %955 = vmatpush2.bf16.msra.mxu0 0
    %956 = vmatprep.subr.bf16.mxu0 0
    %957 = vmatpush2.bf16.msra.mxu0 0
    %958 = vmatprep.mubr.bf16.mxu0 0
    %959 = vmatmul.mubr.bf16.gmra.mxu0 %v924
    %v960 = vpop.f32.mrf.mxu0
    %v961 = vadd.f32 0.0, %v960
    %v962 = vpop.f32.mrf.mxu0
    %v963 = vadd.f32 0.0, %v962
    %v964 = vpop.f32.mrf.mxu0
    %v965 = vpop.f32.mrf.mxu0
    %966 = vdwg.mxu0
    %v967 = vadd.f32 %v871, %v961
    %v968 = vadd.f32 %v872, %v963
    %v969 = vld [vmem:[%s4] sm:$0x3]
    %v971 = vlaneseq
    %v972 = vshrl.u32 %v971, 7
    %v973 = vsub.s32 0, %v972
    %v974 = vrot.slane %v969, %v973
    %v975 = vlaneseq
    %v976 = vshrl.u32 %v975, 7
    %v977 = vsub.s32 1, %v976
    %v978 = vrot.slane %v969, %v977
    %v981 = vadd.f32 %v967, %v974
    %v982 = vadd.f32 %v968, %v978
    %v983 = vmax.f32 %v981, 0.0
    %v984 = vmax.f32 %v982, 0.0
    %v985 = vpack.c.bf16 %v983, %v983
    %v986 = vpack.c.bf16 %v984, %v984
    %v987 = vld [vmem:[%s5] sm:$0xff]
    %v988 = vld [vmem:[%s5 + $0x8] sm:$0xff]
    %v989 = vld [vmem:[%s5 + $0x10] sm:$0xff]
    %v990 = vld [vmem:[%s5 + $0x18] sm:$0xff]
    %v991 = vld [vmem:[%s5 + $0x20] sm:$0xff]
    %v992 = vld [vmem:[%s5 + $0x28] sm:$0xff]
    %v993 = vld [vmem:[%s5 + $0x30] sm:$0xff]
    %v994 = vld [vmem:[%s5 + $0x38] sm:$0xff]
    %v995 = vld [vmem:[%s5 + $0x40] sm:$0xff]
    %v996 = vld [vmem:[%s5 + $0x48] sm:$0xff]
    %v997 = vld [vmem:[%s5 + $0x50] sm:$0xff]
    %v998 = vld [vmem:[%s5 + $0x58] sm:$0xff]
    %v999 = vld [vmem:[%s5 + $0x60] sm:$0xff]
    %v1000 = vld [vmem:[%s5 + $0x68] sm:$0xff]
    %v1001 = vld [vmem:[%s5 + $0x70] sm:$0xff]
    %v1002 = vld [vmem:[%s5 + $0x78] sm:$0xff]
    %v1003 = vld [vmem:[%s5 + $0x80] sm:$0xff]
    %v1004 = vld [vmem:[%s5 + $0x88] sm:$0xff]
    %v1005 = vld [vmem:[%s5 + $0x90] sm:$0xff]
    %v1006 = vld [vmem:[%s5 + $0x98] sm:$0xff]
    %v1007 = vld [vmem:[%s5 + $0xa0] sm:$0xff]
    %v1008 = vld [vmem:[%s5 + $0xa8] sm:$0xff]
    %v1009 = vld [vmem:[%s5 + $0xb0] sm:$0xff]
    %v1010 = vld [vmem:[%s5 + $0xb8] sm:$0xff]
    %v1011 = vld [vmem:[%s5 + $0xc0] sm:$0xff]
    %v1012 = vld [vmem:[%s5 + $0xc8] sm:$0xff]
    %v1013 = vld [vmem:[%s5 + $0xd0] sm:$0xff]
    %v1014 = vld [vmem:[%s5 + $0xd8] sm:$0xff]
    %v1015 = vld [vmem:[%s5 + $0xe0] sm:$0xff]
    %v1016 = vld [vmem:[%s5 + $0xe8] sm:$0xff]
    %v1017 = vld [vmem:[%s5 + $0xf0] sm:$0xff]
    %v1018 = vld [vmem:[%s5 + $0xf8] sm:$0xff]
    %v1019 = vld [vmem:[%s6] sm:$0x3]
    %v1021 = vlaneseq
    %v1022 = vshrl.u32 %v1021, 7
    %v1023 = vsub.s32 0, %v1022
    %v1024 = vrot.slane %v1019, %v1023
    %v1025 = vlaneseq
    %v1026 = vshrl.u32 %v1025, 7
    %v1027 = vsub.s32 1, %v1026
    %v1028 = vrot.slane %v1019, %v1027
    %v1063 = vunpack.c.l.b16 %v987
    %v1064 = vunpack.c.h.b16 %v987
    %v1065 = vunpack.c.l.b16 %v988
    %v1066 = vunpack.c.h.b16 %v988
    %v1067 = vunpack.c.l.b16 %v989
    %v1068 = vunpack.c.h.b16 %v989
    %v1069 = vunpack.c.l.b16 %v990
    %v1070 = vunpack.c.h.b16 %v990
    %v1071 = vunpack.c.l.b16 %v991
    %v1072 = vunpack.c.h.b16 %v991
    %v1073 = vunpack.c.l.b16 %v992
    %v1074 = vunpack.c.h.b16 %v992
    %v1075 = vunpack.c.l.b16 %v993
    %v1076 = vunpack.c.h.b16 %v993
    %v1077 = vunpack.c.l.b16 %v994
    %v1078 = vunpack.c.h.b16 %v994
    %v1079 = vunpack.c.l.b16 %v995
    %v1080 = vunpack.c.h.b16 %v995
    %v1081 = vunpack.c.l.b16 %v996
    %v1082 = vunpack.c.h.b16 %v996
    %v1083 = vunpack.c.l.b16 %v997
    %v1084 = vunpack.c.h.b16 %v997
    %v1085 = vunpack.c.l.b16 %v998
    %v1086 = vunpack.c.h.b16 %v998
    %v1087 = vunpack.c.l.b16 %v999
    %v1088 = vunpack.c.h.b16 %v999
    %v1089 = vunpack.c.l.b16 %v1000
    %v1090 = vunpack.c.h.b16 %v1000
    %v1091 = vunpack.c.l.b16 %v1001
    %v1092 = vunpack.c.h.b16 %v1001
    %v1093 = vunpack.c.l.b16 %v1002
    %v1094 = vunpack.c.h.b16 %v1002
    %v1095 = vunpack.c.l.b16 %v1003
    %v1096 = vunpack.c.h.b16 %v1003
    %v1097 = vunpack.c.l.b16 %v1004
    %v1098 = vunpack.c.h.b16 %v1004
    %v1099 = vunpack.c.l.b16 %v1005
    %v1100 = vunpack.c.h.b16 %v1005
    %v1101 = vunpack.c.l.b16 %v1006
    %v1102 = vunpack.c.h.b16 %v1006
    %v1103 = vunpack.c.l.b16 %v1007
    %v1104 = vunpack.c.h.b16 %v1007
    %v1105 = vunpack.c.l.b16 %v1008
    %v1106 = vunpack.c.h.b16 %v1008
    %v1107 = vunpack.c.l.b16 %v1009
    %v1108 = vunpack.c.h.b16 %v1009
    %v1109 = vunpack.c.l.b16 %v1010
    %v1110 = vunpack.c.h.b16 %v1010
    %v1111 = vunpack.c.l.b16 %v1011
    %v1112 = vunpack.c.h.b16 %v1011
    %v1113 = vunpack.c.l.b16 %v1012
    %v1114 = vunpack.c.h.b16 %v1012
    %v1115 = vunpack.c.l.b16 %v1013
    %v1116 = vunpack.c.h.b16 %v1013
    %v1117 = vunpack.c.l.b16 %v1014
    %v1118 = vunpack.c.h.b16 %v1014
    %v1119 = vunpack.c.l.b16 %v1015
    %v1120 = vunpack.c.h.b16 %v1015
    %v1121 = vunpack.c.l.b16 %v1016
    %v1122 = vunpack.c.h.b16 %v1016
    %v1123 = vunpack.c.l.b16 %v1017
    %v1124 = vunpack.c.h.b16 %v1017
    %v1125 = vunpack.c.l.b16 %v1018
    %v1126 = vunpack.c.h.b16 %v1018
    %v1127 = vpack.c.b16 %v1065, %v1063
    %v1128 = vpack.c.b16 %v1066, %v1064
    %v1129 = vpack.c.b16 %v1069, %v1067
    %v1130 = vpack.c.b16 %v1070, %v1068
    %v1131 = vpack.c.b16 %v1073, %v1071
    %v1132 = vpack.c.b16 %v1074, %v1072
    %v1133 = vpack.c.b16 %v1077, %v1075
    %v1134 = vpack.c.b16 %v1078, %v1076
    %v1135 = vpack.c.b16 %v1081, %v1079
    %v1136 = vpack.c.b16 %v1082, %v1080
    %v1137 = vpack.c.b16 %v1085, %v1083
    %v1138 = vpack.c.b16 %v1086, %v1084
    %v1139 = vpack.c.b16 %v1089, %v1087
    %v1140 = vpack.c.b16 %v1090, %v1088
    %v1141 = vpack.c.b16 %v1093, %v1091
    %v1142 = vpack.c.b16 %v1094, %v1092
    %v1143 = vpack.c.b16 %v1097, %v1095
    %v1144 = vpack.c.b16 %v1098, %v1096
    %v1145 = vpack.c.b16 %v1101, %v1099
    %v1146 = vpack.c.b16 %v1102, %v1100
    %v1147 = vpack.c.b16 %v1105, %v1103
    %v1148 = vpack.c.b16 %v1106, %v1104
    %v1149 = vpack.c.b16 %v1109, %v1107
    %v1150 = vpack.c.b16 %v1110, %v1108
    %v1151 = vpack.c.b16 %v1113, %v1111
    %v1152 = vpack.c.b16 %v1114, %v1112
    %v1153 = vpack.c.b16 %v1117, %v1115
    %v1154 = vpack.c.b16 %v1118, %v1116
    %v1155 = vpack.c.b16 %v1121, %v1119
    %v1156 = vpack.c.b16 %v1122, %v1120
    %v1157 = vpack.c.b16 %v1125, %v1123
    %v1158 = vpack.c.b16 %v1126, %v1124
    %1191 = vmatprep.subr.bf16.mxu0 %v1142
    %1192 = vmatpush1.bf16.msra.mxu0 %v1141
    %1193 = vmatprep.subr.bf16.mxu0 %v1140
    %1194 = vmatpush1.bf16.msra.mxu0 %v1139
    %1195 = vmatprep.subr.bf16.mxu0 %v1138
    %1196 = vmatpush1.bf16.msra.mxu0 %v1137
    %1197 = vmatprep.subr.bf16.mxu0 %v1136
    %1198 = vmatpush1.bf16.msra.mxu0 %v1135
    %1199 = vmatprep.subr.bf16.mxu0 %v1134
    %1200 = vmatpush1.bf16.msra.mxu0 %v1133
    %1201 = vmatprep.subr.bf16.mxu0 %v1132
    %1202 = vmatpush1.bf16.msra.mxu0 %v1131
    %1203 = vmatprep.subr.bf16.mxu0 %v1130
    %1204 = vmatpush1.bf16.msra.mxu0 %v1129
    %1205 = vmatprep.subr.bf16.mxu0 %v1128
    %1206 = vmatpush1.bf16.msra.mxu0 %v1127
    %1207 = vmatprep.subr.bf16.mxu0 %v1158
    %1208 = vmatpush2.bf16.msra.mxu0 %v1157
    %1209 = vmatprep.subr.bf16.mxu0 %v1156
    %1210 = vmatpush2.bf16.msra.mxu0 %v1155
    %1211 = vmatprep.subr.bf16.mxu0 %v1154
    %1212 = vmatpush2.bf16.msra.mxu0 %v1153
    %1213 = vmatprep.subr.bf16.mxu0 %v1152
    %1214 = vmatpush2.bf16.msra.mxu0 %v1151
    %1215 = vmatprep.subr.bf16.mxu0 %v1150
    %1216 = vmatpush2.bf16.msra.mxu0 %v1149
    %1217 = vmatprep.subr.bf16.mxu0 %v1148
    %1218 = vmatpush2.bf16.msra.mxu0 %v1147
    %1219 = vmatprep.subr.bf16.mxu0 %v1146
    %1220 = vmatpush2.bf16.msra.mxu0 %v1145
    %1221 = vmatprep.subr.bf16.mxu0 %v1144
    %1222 = vmatpush2.bf16.msra.mxu0 %v1143
    %1223 = vmatprep.mubr.bf16.mxu0 %v986
    %1224 = vmatmul.mubr.bf16.gmra.mxu0 %v985
    %v1225 = vpop.f32.mrf.mxu0
    %v1226 = vadd.f32 %v1024, %v1225
    %v1227 = vpop.f32.mrf.mxu0
    %v1228 = vadd.f32 %v1028, %v1227
    %v1229 = vpop.f32.mrf.mxu0
    %v1230 = vpop.f32.mrf.mxu0
    %1231 = vdwg.mxu0
    %v1232 = vmax.f32 %v1226, 0.0
    %v1233 = vmax.f32 %v1228, 0.0
    %v1234 = vpack.c.bf16 %v1232, %v1232
    %v1235 = vpack.c.bf16 %v1233, %v1233
    %v1236 = vld [vmem:[%s7] sm:$0xf]
    %v1237 = vld [vmem:[%s7 + $0x4] sm:$0xf]
    %v1238 = vld [vmem:[%s7 + $0x8] sm:$0xf]
    %v1239 = vld [vmem:[%s7 + $0xc] sm:$0xf]
    %v1240 = vld [vmem:[%s7 + $0x10] sm:$0xf]
    %v1241 = vld [vmem:[%s7 + $0x14] sm:$0xf]
    %v1242 = vld [vmem:[%s7 + $0x18] sm:$0xf]
    %v1243 = vld [vmem:[%s7 + $0x1c] sm:$0xf]
    %v1244 = vld [vmem:[%s7 + $0x20] sm:$0xf]
    %v1245 = vld [vmem:[%s7 + $0x24] sm:$0xf]
    %v1246 = vld [vmem:[%s7 + $0x28] sm:$0xf]
    %v1247 = vld [vmem:[%s7 + $0x2c] sm:$0xf]
    %v1248 = vld [vmem:[%s7 + $0x30] sm:$0xf]
    %v1249 = vld [vmem:[%s7 + $0x34] sm:$0xf]
    %v1250 = vld [vmem:[%s7 + $0x38] sm:$0xf]
    %v1251 = vld [vmem:[%s7 + $0x3c] sm:$0xf]
    %v1252 = vld [vmem:[%s7 + $0x40] sm:$0xf]
    %v1253 = vld [vmem:[%s7 + $0x44] sm:$0xf]
    %v1254 = vld [vmem:[%s7 + $0x48] sm:$0xf]
    %v1255 = vld [vmem:[%s7 + $0x4c] sm:$0xf]
    %v1256 = vld [vmem:[%s7 + $0x50] sm:$0xf]
    %v1257 = vld [vmem:[%s7 + $0x54] sm:$0xf]
    %v1258 = vld [vmem:[%s7 + $0x58] sm:$0xf]
    %v1259 = vld [vmem:[%s7 + $0x5c] sm:$0xf]
    %v1260 = vld [vmem:[%s7 + $0x60] sm:$0xf]
    %v1261 = vld [vmem:[%s7 + $0x64] sm:$0xf]
    %v1262 = vld [vmem:[%s7 + $0x68] sm:$0xf]
    %v1263 = vld [vmem:[%s7 + $0x6c] sm:$0xf]
    %v1264 = vld [vmem:[%s7 + $0x70] sm:$0xf]
    %v1265 = vld [vmem:[%s7 + $0x74] sm:$0xf]
    %v1266 = vld [vmem:[%s7 + $0x78] sm:$0xf]
    %v1267 = vld [vmem:[%s7 + $0x7c] sm:$0xf]
    %v1268 = vld [vmem:[%s8] sm:$0x1]
    %v1270 = vlaneseq
    %v1271 = vshrl.u32 %v1270, 7
    %v1272 = vsub.s32 0, %v1271
    %v1273 = vrot.slane %v1268, %v1272
    %v1307 = vunpack.c.l.b16 %v1236
    %v1308 = vunpack.c.l.b16 %v1237
    %v1309 = vunpack.c.l.b16 %v1238
    %v1310 = vunpack.c.l.b16 %v1239
    %v1311 = vunpack.c.l.b16 %v1240
    %v1312 = vunpack.c.l.b16 %v1241
    %v1313 = vunpack.c.l.b16 %v1242
    %v1314 = vunpack.c.l.b16 %v1243
    %v1315 = vunpack.c.l.b16 %v1244
    %v1316 = vunpack.c.l.b16 %v1245
    %v1317 = vunpack.c.l.b16 %v1246
    %v1318 = vunpack.c.l.b16 %v1247
    %v1319 = vunpack.c.l.b16 %v1248
    %v1320 = vunpack.c.l.b16 %v1249
    %v1321 = vunpack.c.l.b16 %v1250
    %v1322 = vunpack.c.l.b16 %v1251
    %v1323 = vunpack.c.l.b16 %v1252
    %v1324 = vunpack.c.l.b16 %v1253
    %v1325 = vunpack.c.l.b16 %v1254
    %v1326 = vunpack.c.l.b16 %v1255
    %v1327 = vunpack.c.l.b16 %v1256
    %v1328 = vunpack.c.l.b16 %v1257
    %v1329 = vunpack.c.l.b16 %v1258
    %v1330 = vunpack.c.l.b16 %v1259
    %v1331 = vunpack.c.l.b16 %v1260
    %v1332 = vunpack.c.l.b16 %v1261
    %v1333 = vunpack.c.l.b16 %v1262
    %v1334 = vunpack.c.l.b16 %v1263
    %v1335 = vunpack.c.l.b16 %v1264
    %v1336 = vunpack.c.l.b16 %v1265
    %v1337 = vunpack.c.l.b16 %v1266
    %v1338 = vunpack.c.l.b16 %v1267
    %v1339 = vpack.c.b16 %v1308, %v1307
    %v1340 = vpack.c.b16 %v1310, %v1309
    %v1341 = vpack.c.b16 %v1312, %v1311
    %v1342 = vpack.c.b16 %v1314, %v1313
    %v1343 = vpack.c.b16 %v1316, %v1315
    %v1344 = vpack.c.b16 %v1318, %v1317
    %v1345 = vpack.c.b16 %v1320, %v1319
    %v1346 = vpack.c.b16 %v1322, %v1321
    %v1347 = vpack.c.b16 %v1324, %v1323
    %v1348 = vpack.c.b16 %v1326, %v1325
    %v1349 = vpack.c.b16 %v1328, %v1327
    %v1350 = vpack.c.b16 %v1330, %v1329
    %v1351 = vpack.c.b16 %v1332, %v1331
    %v1352 = vpack.c.b16 %v1334, %v1333
    %v1353 = vpack.c.b16 %v1336, %v1335
    %v1354 = vpack.c.b16 %v1338, %v1337
    %1371 = vmatprep.subr.bf16.mxu0 0
    %1372 = vmatpush1.bf16.msra.mxu0 %v1346
    %1373 = vmatprep.subr.bf16.mxu0 0
    %1374 = vmatpush1.bf16.msra.mxu0 %v1345
    %1375 = vmatprep.subr.bf16.mxu0 0
    %1376 = vmatpush1.bf16.msra.mxu0 %v1344
    %1377 = vmatprep.subr.bf16.mxu0 0
    %1378 = vmatpush1.bf16.msra.mxu0 %v1343
    %1379 = vmatprep.subr.bf16.mxu0 0
    %1380 = vmatpush1.bf16.msra.mxu0 %v1342
    %1381 = vmatprep.subr.bf16.mxu0 0
    %1382 = vmatpush1.bf16.msra.mxu0 %v1341
    %1383 = vmatprep.subr.bf16.mxu0 0
    %1384 = vmatpush1.bf16.msra.mxu0 %v1340
    %1385 = vmatprep.subr.bf16.mxu0 0
    %1386 = vmatpush1.bf16.msra.mxu0 %v1339
    %1387 = vmatprep.subr.bf16.mxu0 0
    %1388 = vmatpush2.bf16.msra.mxu0 %v1354
    %1389 = vmatprep.subr.bf16.mxu0 0
    %1390 = vmatpush2.bf16.msra.mxu0 %v1353
    %1391 = vmatprep.subr.bf16.mxu0 0
    %1392 = vmatpush2.bf16.msra.mxu0 %v1352
    %1393 = vmatprep.subr.bf16.mxu0 0
    %1394 = vmatpush2.bf16.msra.mxu0 %v1351
    %1395 = vmatprep.subr.bf16.mxu0 0
    %1396 = vmatpush2.bf16.msra.mxu0 %v1350
    %1397 = vmatprep.subr.bf16.mxu0 0
    %1398 = vmatpush2.bf16.msra.mxu0 %v1349
    %1399 = vmatprep.subr.bf16.mxu0 0
    %1400 = vmatpush2.bf16.msra.mxu0 %v1348
    %1401 = vmatprep.subr.bf16.mxu0 0
    %1402 = vmatpush2.bf16.msra.mxu0 %v1347
    %1403 = vmatprep.mubr.bf16.mxu0 %v1235
    %1404 = vmatmul.mubr.bf16.gmra.mxu0 %v1234
    %v1405 = vpop.f32.mrf.mxu0
    %v1406 = vadd.f32 %v1273, %v1405
    %v1407 = vpop.f32.mrf.mxu0
    %v1408 = vpop.f32.mrf.mxu0
    %v1409 = vpop.f32.mrf.mxu0
    %1410 = vdwg.mxu0
    %vm1411 = vcmask 74752
    %1412 = vst.msk [vmem:[#allocation2] sm:$0x3] %vm1411, %v1406
    // Predicated region
    $region38: #{vgg_forward.3} parent=1 // pred_check
      _
    $region39: #{vgg_forward.3} parent=1 // pred_check_branch
      %1414 = sbr.rel (0) target = $region41
    $region40: #{vgg_forward.3} parent=1 // pred_region
      %s1416 = ssub.s32 32, 32
      %1417 = vsyncadd [#allocation3], %s1416
      %s1419 = sshll.u32 [#allocation2], 4
      %s1420 = int_to_ptr.vmem [resolvable:$true] %s1419
      %1422 = dma.vmem_to_hbm [thread:$0]  %s1420, 32, %s9, [#allocation3]
    $region41: #{vgg_forward.3} parent=1 // pred_fallthru
      _
    // Predicated region
    $region42: #{vgg_forward.3} parent=1 // pred_check
      _
    $region43: #{vgg_forward.3} parent=1 // pred_check_branch
      %1424 = sbr.rel (0) target = $region45
    $region44: #{vgg_forward.3} parent=1 // pred_region
      %1425 = dma.done [#allocation3], 32
    $region45: #{vgg_forward.3} parent=1 // pred_fallthru
      _
    %1426 = vsyncpa [#allocation3], 1

</llo_original>
